<compile_context>
chip_gen: v6e
topology: v6e:2x2x1
jax: 0.10.0
libtpu: 0.0.40
codegen_flags: <defaults>
</compile_context>

<pallas_src>
import jax
import jax.numpy as jnp
import numpy as np
from jax.experimental import pallas as pl
from jax.experimental.pallas import tpu as pltpu


# --------------------------------------------------------------------------- #
# Kernel
# --------------------------------------------------------------------------- #
def _deup_cat_kernel(x_ref, prev_ref, wx_ref, w3p2_ref, b_ref, o_ref):
    # x:    (TH, W, Cin)            source voxels, channels-last
    # prev: (2, TH, 2, W, 2*Cout)   dims = (p, h, q, w, r*Cout + c)
    # wx:   (2, 2, Cin, 2*Cout)     pre-composed  W1 . W2_pqr . W3_y   (columns r-major)
    # w3p2: (2*Cout, 2*Cout)        block-diag(W3_prev, W3_prev)
    # b:    (2, 2, 1, 2*Cout)       pre-composed bias per (p, q, r)
    # o:    (2, TH, 2, W, 2*Cout)
    th, w, cin = x_ref.shape
    c2 = o_ref.shape[-1]
    tm = th * w

    # Free row merge: either W % 8 == 0 (sublane-tile preserving) or TH == 1.
    xm = x_ref[...].reshape(tm, cin)
    w3p2 = w3p2_ref[...]                       # hoisted: loaded once per grid step

    for p in range(2):
        for q in range(2):
            # x half: one (TM, Cin) x (Cin, 2*Cout) dot -> lane-dense columns (r, c).
            acc = jnp.dot(xm, wx_ref[p, q], preferred_element_type=jnp.float32)
            # prev half: one dot against the block-diagonal weight (single MXU
            # stream; replaces 8 small dots + concatenate of the old kernel).
            pv = prev_ref[p, :, q, :, :].reshape(tm, c2)
            acc = acc + jnp.dot(pv, w3p2, preferred_element_type=jnp.float32)
            acc = acc + b_ref[p, q]            # (1, 2*Cout) f32 bias, broadcast add
            # Store straight into the (p, q) output slice — no big temporaries.
            o_ref[p, :, q, :, :] = acc.reshape(th, w, c2).astype(o_ref.dtype)


# --------------------------------------------------------------------------- #
# Weight pre-composition (tiny, done once, in f32)
# --------------------------------------------------------------------------- #
def _precompose(params, cin, cout, compute_dtype):
    w1, b1, w2, b2, w3, b3 = (params[k] for k in ("w1", "b1", "w2", "b2", "w3", "b3"))
    f32 = jnp.float32

    w1m = w1[:, :, 0, 0, 0].T.astype(f32)                                   # (Cin, Cout)
    w2m = jnp.transpose(w2, (2, 3, 4, 0, 1)).reshape(8, cout, cout).astype(f32)  # a=p*4+q*2+r
    w3p = w3[:, :cout, 0, 0, 0].T.astype(f32)                               # (Cout, Cout)  prev half
    w3y = w3[:, cout:, 0, 0, 0].T.astype(f32)                               # (Cout, Cout)  y half

    # Wx_a = W1 . W2_a . W3_y   -> packed as (p, q, Cin, r*Cout + c)
    wx = jnp.einsum("ic,acd,de->aie", w1m, w2m, w3y)                        # (8, Cin, Cout)
    wx = wx.reshape(2, 2, 2, cin, cout).transpose(0, 1, 3, 2, 4).reshape(2, 2, cin, 2 * cout)

    # bias_a = (b1 . W2_a + b2) . W3_y + b3   -> (p, q, 1, r*Cout + c), kept f32.
    bias = (jnp.einsum("c,acd->ad", b1.astype(f32), w2m) + b2.astype(f32)[None, :]) @ w3y
    bias = (bias + b3.astype(f32)[None, :]).reshape(2, 2, 2 * cout)[:, :, None, :]

    # Block-diagonal prev weight: columns/rows are (r, channel) merged.
    w3p2 = jnp.kron(jnp.eye(2, dtype=f32), w3p)                             # (2C, 2C)

    return wx.astype(compute_dtype), w3p2.astype(compute_dtype), bias


def _vmem_capacity_bytes():
    try:
        info = pltpu.get_tpu_info()
        for name in ("vmem_capacity_bytes", "vmem_size_bytes", "vmem_bytes"):
            v = getattr(info, name, None)
            if v:
                return int(v)
    except Exception:
        pass
    return 64 << 20   # assume v7x (most restrictive) if the query is unavailable


# --------------------------------------------------------------------------- #
# Channels-last (NDHWC) fast path — no XLA relayouts at all.
# --------------------------------------------------------------------------- #
def deup_cat_forward_ndhwc(x, prev, params, *, compute_dtype=jnp.bfloat16, out_dtype=None):
    """x: (N, D, H, W, Cin); prev: (N, 2D, 2H, 2W, Cout) — both channels-last."""
    N, D, H, W, Cin = x.shape
    Cout = params["w1"].shape[0]
    C2 = 2 * Cout
    assert prev.shape == (N, 2 * D, 2 * H, 2 * W, Cout), prev.shape
    if out_dtype is None:
        out_dtype = x.dtype

    wx, w3p2, bias = _precompose(params, Cin, Cout, compute_dtype)

    # Free (contiguity-preserving) views — no HBM relayout, no pad.
    x_c = x.astype(compute_dtype)
    prev_v = prev.astype(compute_dtype).reshape(N, D, 2, H, 2, W, C2)

    esz = np.dtype(compute_dtype).itemsize
    oesz = np.dtype(out_dtype).itemsize
    vmem_cap = _vmem_capacity_bytes()

    def step_bytes(t):       # bytes of the three streamed blocks per grid step
        rows = t * W
        return rows * Cin * esz + 8 * rows * Cout * esz + 8 * rows * Cout * oesz

    # Row tile = TH rows of H (times full W). Keep the in-kernel row merge free.
    if W % 8 != 0:
        th = 1
    else:
        budget = max(2 << 20, min(16 << 20, vmem_cap // 8))   # per-step stream budget
        divs = [t for t in range(H, 0, -1) if H % t == 0]
        th = 1
        for t in divs:
            if t * W <= 2048 and step_bytes(t) <= budget:
                th = t
                break
        # keep >= 4 grid steps so double buffering + the v7x 2-TC split stay useful
        while th > 1 and N * D * (H // th) < 4:
            th = max(t for t in divs if t < th)

    grid = (N, D, H // th)

    # VMEM limit derived from the actual working set (2x for double-buffered
    # streams and weights, plus the transient f32 accumulator), capped 8 MiB
    # under the chip's physical VMEM.
    weight_bytes = 2 * (wx.size * esz + w3p2.size * esz + bias.size * 4)
    vmem_limit = 2 * step_bytes(th) + weight_bytes + 2 * th * W * C2 * 4 + (8 << 20)
    vmem_limit = int(min(max(vmem_limit, 32 << 20), max(32 << 20, vmem_cap - (8 << 20))))

    out_v = pl.pallas_call(
        _deup_cat_kernel,
        out_shape=jax.ShapeDtypeStruct((N, D, 2, H, 2, W, C2), out_dtype),
        grid=grid,
        in_specs=[
            # x view (N, D, H, W, Cin): squeeze N, D; tile H; full W, Cin.
            pl.BlockSpec((None, None, th, W, Cin), lambda n, d, h: (n, d, h, 0, 0)),
            # prev view (N, D, 2, H, 2, W, 2*Cout): squeeze N, D; tile H; rest full.
            pl.BlockSpec((None, None, 2, th, 2, W, C2),
                         lambda n, d, h: (n, d, 0, h, 0, 0, 0)),
            # Loop-invariant operands: constant index_map -> DMA'd once, resident.
            # (pl.Buffered(1) would drop their second VMEM copy; skipped since the
            #  working set is already far below every chip's VMEM capacity.)
            pl.BlockSpec((2, 2, Cin, C2), lambda n, d, h: (0, 0, 0, 0)),
            pl.BlockSpec((C2, C2), lambda n, d, h: (0, 0)),
            pl.BlockSpec((2, 2, 1, C2), lambda n, d, h: (0, 0, 0, 0)),
        ],
        out_specs=pl.BlockSpec((None, None, 2, th, 2, W, C2),
                               lambda n, d, h: (n, d, 0, h, 0, 0, 0)),
        compiler_params=pltpu.CompilerParams(
            dimension_semantics=("parallel", "parallel", "parallel"),
            vmem_limit_bytes=vmem_limit,
        ),
    )(x_c, prev_v, wx, w3p2, bias)

    # Free reshape back to channels-last NDHWC.
    return out_v.reshape(N, 2 * D, 2 * H, 2 * W, Cout)


# --------------------------------------------------------------------------- #
# PyTorch-compatible NCDHW entry point (matches the nn.Module contract).
# --------------------------------------------------------------------------- #
def deup_cat_forward(x, prev, params, *, compute_dtype=jnp.bfloat16, out_dtype=None):
    """x: (N, Cin, D, H, W); prev: (N, Cout, 2D, 2H, 2W)  — PyTorch NCDHW."""
    # TODO(synk): keep the decoder channels-last (NDHWC) between layers and call
    # deup_cat_forward_ndhwc directly; these boundary transposes then disappear.
    x_ndhwc = jnp.transpose(x, (0, 2, 3, 4, 1))
    prev_ndhwc = jnp.transpose(prev, (0, 2, 3, 4, 1))
    out = deup_cat_forward_ndhwc(x_ndhwc, prev_ndhwc, params,
                                 compute_dtype=compute_dtype, out_dtype=out_dtype)
    return jnp.transpose(out, (0, 4, 1, 2, 3))


# --------------------------------------------------------------------------- #
# Pure-jnp reference (NCDHW, f32) mirroring the PyTorch semantics.
# --------------------------------------------------------------------------- #
def deup_cat_reference(x, prev, params):
    w1, b1, w2, b2, w3, b3 = (params[k] for k in ("w1", "b1", "w2", "b2", "w3", "b3"))
    N, Cin, D, H, W = x.shape
    Cout = w1.shape[0]
    x1 = jnp.einsum("nidhw,oi->nodhw", x, w1[:, :, 0, 0, 0]) \
        + b1[None, :, None, None, None]
    y = jnp.einsum("nidhw,iopqr->nodphqwr", x1, w2).reshape(
        N, Cout, 2 * D, 2 * H, 2 * W) + b2[None, :, None, None, None]
    cat = jnp.concatenate([prev, y], axis=1)
    out = jnp.einsum("nidhw,oi->nodhw", cat, w3[:, :, 0, 0, 0]) \
        + b3[None, :, None, None, None]
    return out


def init_params(key, in_channels, out_channels):
    ks = jax.random.split(key, 6)
    f = jnp.float32
    return {
        "w1": 0.1 * jax.random.normal(ks[0], (out_channels, in_channels, 1, 1, 1), f),
        "b1": 0.1 * jax.random.normal(ks[1], (out_channels,), f),
        "w2": 0.1 * jax.random.normal(ks[2], (out_channels, out_channels, 2, 2, 2), f),
        "b2": 0.1 * jax.random.normal(ks[3], (out_channels,), f),
        "w3": 0.1 * jax.random.normal(ks[4], (out_channels, 2 * out_channels, 1, 1, 1), f),
        "b3": 0.1 * jax.random.normal(ks[5], (out_channels,), f),
    }


if __name__ == "__main__":
    key = jax.random.PRNGKey(0)
    k1, k2, k3, k4, k5, k6 = jax.random.split(key, 6)

    # ---- Case 1: W % 8 == 0 -> tiled fast path (TH > 1, free in-kernel merges) --
    N, Cin, Cout, D, H, W = 2, 16, 8, 8, 8, 8
    x = jax.random.normal(k1, (N, Cin, D, H, W), jnp.float32)
    prev = jax.random.normal(k2, (N, Cout, 2 * D, 2 * H, 2 * W), jnp.float32)
    params = init_params(k3, Cin, Cout)
    ref = deup_cat_reference(x, prev, params)

    out_f32 = jax.block_until_ready(
        deup_cat_forward(x, prev, params, compute_dtype=jnp.float32,
                         out_dtype=jnp.float32))
    assert out_f32.shape == (N, Cout, 2 * D, 2 * H, 2 * W), out_f32.shape
    assert jnp.allclose(out_f32, ref, atol=1e-4, rtol=1e-4), "f32 mismatch (case 1)"

    # Default path: bf16 operands, f32 accumulation, output dtype matches input.
    out_bf16 = jax.block_until_ready(deup_cat_forward(x, prev, params))
    assert out_bf16.dtype == jnp.float32
    assert jnp.allclose(out_bf16, ref, atol=5e-2, rtol=5e-2), "bf16 mismatch (case 1)"

    # ---- Case 2: W % 8 != 0 -> TH=1 fallback (full-extent trailing dims) --------
    N2, Cin2, Cout2, S2 = 1, 8, 4, 4
    x2 = jax.random.normal(k4, (N2, Cin2, S2, S2, S2), jnp.float32)
    prev2 = jax.random.normal(k5, (N2, Cout2, 2 * S2, 2 * S2, 2 * S2), jnp.float32)
    params2 = init_params(k6, Cin2, Cout2)
    ref2 = deup_cat_reference(x2, prev2, params2)
    out2 = jax.block_until_ready(
        deup_cat_forward(x2, prev2, params2, compute_dtype=jnp.float32,
                         out_dtype=jnp.float32))
    assert jnp.allclose(out2, ref2, atol=1e-4, rtol=1e-4), "f32 mismatch (case 2)"

    print("KERNEL_OK")
</pallas_src>

<mosaic_0001>
module attributes {stable_mosaic.version = 11 : i64} {
  func.func @_deup_cat_kernel(%arg0: i32, %arg1: i32, %arg2: i32, %arg3: memref<1x1x8x8x16xf32, #tpu.memory_space<vmem>>, %arg4: memref<1x1x2x8x2x8x16xf32, #tpu.memory_space<vmem>>, %arg5: memref<2x2x16x16xf32, #tpu.memory_space<vmem>>, %arg6: memref<16x16xf32, #tpu.memory_space<vmem>>, %arg7: memref<2x2x1x16xf32, #tpu.memory_space<vmem>>, %arg8: memref<1x1x2x8x2x8x16xf32, #tpu.memory_space<vmem>>) attributes {dimension_semantics = [#tpu.dimension_semantics<parallel>, #tpu.dimension_semantics<parallel>, #tpu.dimension_semantics<parallel>], iteration_bounds = array<i64: 2, 8, 1>, scalar_prefetch = 0 : i64, scratch_operands = 0 : i64, tpu.core_type = #tpu.core_type<tc>, window_params = [{transform_indices = @transform_0, window_bounds = array<i64: 1, 1, 8, 8, 16>}, {transform_indices = @transform_1, window_bounds = array<i64: 1, 1, 2, 8, 2, 8, 16>}, {pipeline_mode = #tpu.pipeline_mode<synchronous>, transform_indices = @transform_2, window_bounds = array<i64: 2, 2, 16, 16>}, {pipeline_mode = #tpu.pipeline_mode<synchronous>, transform_indices = @transform_3, window_bounds = array<i64: 16, 16>}, {pipeline_mode = #tpu.pipeline_mode<synchronous>, transform_indices = @transform_4, window_bounds = array<i64: 2, 2, 1, 16>}, {transform_indices = @transform_5, window_bounds = array<i64: 1, 1, 2, 8, 2, 8, 16>}]} {
    %c0 = arith.constant 0 : index
    %c0_0 = arith.constant 0 : index
    %c0_1 = arith.constant 0 : index
    %c0_2 = arith.constant 0 : index
    %c0_3 = arith.constant 0 : index
    %0 = vector.load %arg3[%c0, %c0_0, %c0_1, %c0_2, %c0_3] : memref<1x1x8x8x16xf32, #tpu.memory_space<vmem>>, vector<1x1x8x8x16xf32>
    %1 = vector.shape_cast %0 : vector<1x1x8x8x16xf32> to vector<8x8x16xf32>
    %2 = vector.shape_cast %1 : vector<8x8x16xf32> to vector<64x16xf32>
    %c0_4 = arith.constant 0 : index
    %c0_5 = arith.constant 0 : index
    %3 = vector.load %arg6[%c0_4, %c0_5] : memref<16x16xf32, #tpu.memory_space<vmem>>, vector<16x16xf32>
    %c0_6 = arith.constant 0 : index
    %c0_7 = arith.constant 0 : index
    %c0_8 = arith.constant 0 : index
    %c0_9 = arith.constant 0 : index
    %4 = vector.load %arg5[%c0_6, %c0_7, %c0_8, %c0_9] : memref<2x2x16x16xf32, #tpu.memory_space<vmem>>, vector<1x1x16x16xf32>
    %5 = vector.shape_cast %4 : vector<1x1x16x16xf32> to vector<16x16xf32>
    %cst = arith.constant dense<0.000000e+00> : vector<64x16xf32>
    %6 = tpu.matmul %2, %5, %cst {dimension_numbers = #tpu.dot_dimension_numbers<[1], [0], [0], [1], [0, 0, 1, 1], [], []>} : vector<64x16xf32>, vector<16x16xf32>, vector<64x16xf32> -> vector<64x16xf32>
    %c0_10 = arith.constant 0 : index
    %c0_11 = arith.constant 0 : index
    %c0_12 = arith.constant 0 : index
    %c0_13 = arith.constant 0 : index
    %c0_14 = arith.constant 0 : index
    %c0_15 = arith.constant 0 : index
    %c0_16 = arith.constant 0 : index
    %7 = vector.load %arg4[%c0_10, %c0_11, %c0_12, %c0_13, %c0_14, %c0_15, %c0_16] : memref<1x1x2x8x2x8x16xf32, #tpu.memory_space<vmem>>, vector<1x1x1x8x1x8x16xf32>
    %8 = vector.shape_cast %7 : vector<1x1x1x8x1x8x16xf32> to vector<8x8x16xf32>
    %9 = vector.shape_cast %8 : vector<8x8x16xf32> to vector<64x16xf32>
    %cst_17 = arith.constant dense<0.000000e+00> : vector<64x16xf32>
    %10 = tpu.matmul %9, %3, %cst_17 {dimension_numbers = #tpu.dot_dimension_numbers<[1], [0], [0], [1], [0, 0, 1, 1], [], []>} : vector<64x16xf32>, vector<16x16xf32>, vector<64x16xf32> -> vector<64x16xf32>
    %11 = arith.addf %6, %10 : vector<64x16xf32>
    %c0_18 = arith.constant 0 : index
    %c0_19 = arith.constant 0 : index
    %c0_20 = arith.constant 0 : index
    %c0_21 = arith.constant 0 : index
    %12 = vector.load %arg7[%c0_18, %c0_19, %c0_20, %c0_21] : memref<2x2x1x16xf32, #tpu.memory_space<vmem>>, vector<1x1x1x16xf32>
    %13 = vector.shape_cast %12 : vector<1x1x1x16xf32> to vector<1x16xf32>
    %14 = vector.broadcast %13 : vector<1x16xf32> to vector<64x16xf32>
    %15 = arith.addf %11, %14 : vector<64x16xf32>
    %16 = vector.shape_cast %15 : vector<64x16xf32> to vector<8x8x16xf32>
    %c0_22 = arith.constant 0 : index
    %c0_23 = arith.constant 0 : index
    %c0_24 = arith.constant 0 : index
    %c0_25 = arith.constant 0 : index
    %c0_26 = arith.constant 0 : index
    %c0_27 = arith.constant 0 : index
    %c0_28 = arith.constant 0 : index
    %17 = vector.load %arg8[%c0_22, %c0_23, %c0_24, %c0_25, %c0_26, %c0_27, %c0_28] : memref<1x1x2x8x2x8x16xf32, #tpu.memory_space<vmem>>, vector<1x1x1x8x1x8x16xf32>
    %18 = vector.shape_cast %17 : vector<1x1x1x8x1x8x16xf32> to vector<8x8x16xf32>
    %19 = vector.shape_cast %16 : vector<8x8x16xf32> to vector<1x1x1x8x1x8x16xf32>
    tpu.vector_store %arg8[%c0_22, %c0_23, %c0_24, %c0_25, %c0_26, %c0_27, %c0_28], %19 {strides = array<i32>} : memref<1x1x2x8x2x8x16xf32, #tpu.memory_space<vmem>>, vector<1x1x1x8x1x8x16xf32>,
    %c0_29 = arith.constant 0 : index
    %c1 = arith.constant 1 : index
    %c0_30 = arith.constant 0 : index
    %c0_31 = arith.constant 0 : index
    %20 = vector.load %arg5[%c0_29, %c1, %c0_30, %c0_31] : memref<2x2x16x16xf32, #tpu.memory_space<vmem>>, vector<1x1x16x16xf32>
    %21 = vector.shape_cast %20 : vector<1x1x16x16xf32> to vector<16x16xf32>
    %cst_32 = arith.constant dense<0.000000e+00> : vector<64x16xf32>
    %22 = tpu.matmul %2, %21, %cst_32 {dimension_numbers = #tpu.dot_dimension_numbers<[1], [0], [0], [1], [0, 0, 1, 1], [], []>} : vector<64x16xf32>, vector<16x16xf32>, vector<64x16xf32> -> vector<64x16xf32>
    %c0_33 = arith.constant 0 : index
    %c0_34 = arith.constant 0 : index
    %c0_35 = arith.constant 0 : index
    %c0_36 = arith.constant 0 : index
    %c1_37 = arith.constant 1 : index
    %c0_38 = arith.constant 0 : index
    %c0_39 = arith.constant 0 : index
    %23 = vector.load %arg4[%c0_33, %c0_34, %c0_35, %c0_36, %c1_37, %c0_38, %c0_39] : memref<1x1x2x8x2x8x16xf32, #tpu.memory_space<vmem>>, vector<1x1x1x8x1x8x16xf32>
    %24 = vector.shape_cast %23 : vector<1x1x1x8x1x8x16xf32> to vector<8x8x16xf32>
    %25 = vector.shape_cast %24 : vector<8x8x16xf32> to vector<64x16xf32>
    %cst_40 = arith.constant dense<0.000000e+00> : vector<64x16xf32>
    %26 = tpu.matmul %25, %3, %cst_40 {dimension_numbers = #tpu.dot_dimension_numbers<[1], [0], [0], [1], [0, 0, 1, 1], [], []>} : vector<64x16xf32>, vector<16x16xf32>, vector<64x16xf32> -> vector<64x16xf32>
    %27 = arith.addf %22, %26 : vector<64x16xf32>
    %c0_41 = arith.constant 0 : index
    %c1_42 = arith.constant 1 : index
    %c0_43 = arith.constant 0 : index
    %c0_44 = arith.constant 0 : index
    %28 = vector.load %arg7[%c0_41, %c1_42, %c0_43, %c0_44] : memref<2x2x1x16xf32, #tpu.memory_space<vmem>>, vector<1x1x1x16xf32>
    %29 = vector.shape_cast %28 : vector<1x1x1x16xf32> to vector<1x16xf32>
    %30 = vector.broadcast %29 : vector<1x16xf32> to vector<64x16xf32>
    %31 = arith.addf %27, %30 : vector<64x16xf32>
    %32 = vector.shape_cast %31 : vector<64x16xf32> to vector<8x8x16xf32>
    %c0_45 = arith.constant 0 : index
    %c0_46 = arith.constant 0 : index
    %c0_47 = arith.constant 0 : index
    %c0_48 = arith.constant 0 : index
    %c1_49 = arith.constant 1 : index
    %c0_50 = arith.constant 0 : index
    %c0_51 = arith.constant 0 : index
    %33 = vector.load %arg8[%c0_45, %c0_46, %c0_47, %c0_48, %c1_49, %c0_50, %c0_51] : memref<1x1x2x8x2x8x16xf32, #tpu.memory_space<vmem>>, vector<1x1x1x8x1x8x16xf32>
    %34 = vector.shape_cast %33 : vector<1x1x1x8x1x8x16xf32> to vector<8x8x16xf32>
    %35 = vector.shape_cast %32 : vector<8x8x16xf32> to vector<1x1x1x8x1x8x16xf32>
    tpu.vector_store %arg8[%c0_45, %c0_46, %c0_47, %c0_48, %c1_49, %c0_50, %c0_51], %35 {strides = array<i32>} : memref<1x1x2x8x2x8x16xf32, #tpu.memory_space<vmem>>, vector<1x1x1x8x1x8x16xf32>,
    %c1_52 = arith.constant 1 : index
    %c0_53 = arith.constant 0 : index
    %c0_54 = arith.constant 0 : index
    %c0_55 = arith.constant 0 : index
    %36 = vector.load %arg5[%c1_52, %c0_53, %c0_54, %c0_55] : memref<2x2x16x16xf32, #tpu.memory_space<vmem>>, vector<1x1x16x16xf32>
    %37 = vector.shape_cast %36 : vector<1x1x16x16xf32> to vector<16x16xf32>
    %cst_56 = arith.constant dense<0.000000e+00> : vector<64x16xf32>
    %38 = tpu.matmul %2, %37, %cst_56 {dimension_numbers = #tpu.dot_dimension_numbers<[1], [0], [0], [1], [0, 0, 1, 1], [], []>} : vector<64x16xf32>, vector<16x16xf32>, vector<64x16xf32> -> vector<64x16xf32>
    %c0_57 = arith.constant 0 : index
    %c0_58 = arith.constant 0 : index
    %c1_59 = arith.constant 1 : index
    %c0_60 = arith.constant 0 : index
    %c0_61 = arith.constant 0 : index
    %c0_62 = arith.constant 0 : index
    %c0_63 = arith.constant 0 : index
    %39 = vector.load %arg4[%c0_57, %c0_58, %c1_59, %c0_60, %c0_61, %c0_62, %c0_63] : memref<1x1x2x8x2x8x16xf32, #tpu.memory_space<vmem>>, vector<1x1x1x8x1x8x16xf32>
    %40 = vector.shape_cast %39 : vector<1x1x1x8x1x8x16xf32> to vector<8x8x16xf32>
    %41 = vector.shape_cast %40 : vector<8x8x16xf32> to vector<64x16xf32>
    %cst_64 = arith.constant dense<0.000000e+00> : vector<64x16xf32>
    %42 = tpu.matmul %41, %3, %cst_64 {dimension_numbers = #tpu.dot_dimension_numbers<[1], [0], [0], [1], [0, 0, 1, 1], [], []>} : vector<64x16xf32>, vector<16x16xf32>, vector<64x16xf32> -> vector<64x16xf32>
    %43 = arith.addf %38, %42 : vector<64x16xf32>
    %c1_65 = arith.constant 1 : index
    %c0_66 = arith.constant 0 : index
    %c0_67 = arith.constant 0 : index
    %c0_68 = arith.constant 0 : index
    %44 = vector.load %arg7[%c1_65, %c0_66, %c0_67, %c0_68] : memref<2x2x1x16xf32, #tpu.memory_space<vmem>>, vector<1x1x1x16xf32>
    %45 = vector.shape_cast %44 : vector<1x1x1x16xf32> to vector<1x16xf32>
    %46 = vector.broadcast %45 : vector<1x16xf32> to vector<64x16xf32>
    %47 = arith.addf %43, %46 : vector<64x16xf32>
    %48 = vector.shape_cast %47 : vector<64x16xf32> to vector<8x8x16xf32>
    %c0_69 = arith.constant 0 : index
    %c0_70 = arith.constant 0 : index
    %c1_71 = arith.constant 1 : index
    %c0_72 = arith.constant 0 : index
    %c0_73 = arith.constant 0 : index
    %c0_74 = arith.constant 0 : index
    %c0_75 = arith.constant 0 : index
    %49 = vector.load %arg8[%c0_69, %c0_70, %c1_71, %c0_72, %c0_73, %c0_74, %c0_75] : memref<1x1x2x8x2x8x16xf32, #tpu.memory_space<vmem>>, vector<1x1x1x8x1x8x16xf32>
    %50 = vector.shape_cast %49 : vector<1x1x1x8x1x8x16xf32> to vector<8x8x16xf32>
    %51 = vector.shape_cast %48 : vector<8x8x16xf32> to vector<1x1x1x8x1x8x16xf32>
    tpu.vector_store %arg8[%c0_69, %c0_70, %c1_71, %c0_72, %c0_73, %c0_74, %c0_75], %51 {strides = array<i32>} : memref<1x1x2x8x2x8x16xf32, #tpu.memory_space<vmem>>, vector<1x1x1x8x1x8x16xf32>,
    %c1_76 = arith.constant 1 : index
    %c1_77 = arith.constant 1 : index
    %c0_78 = arith.constant 0 : index
    %c0_79 = arith.constant 0 : index
    %52 = vector.load %arg5[%c1_76, %c1_77, %c0_78, %c0_79] : memref<2x2x16x16xf32, #tpu.memory_space<vmem>>, vector<1x1x16x16xf32>
    %53 = vector.shape_cast %52 : vector<1x1x16x16xf32> to vector<16x16xf32>
    %cst_80 = arith.constant dense<0.000000e+00> : vector<64x16xf32>
    %54 = tpu.matmul %2, %53, %cst_80 {dimension_numbers = #tpu.dot_dimension_numbers<[1], [0], [0], [1], [0, 0, 1, 1], [], []>} : vector<64x16xf32>, vector<16x16xf32>, vector<64x16xf32> -> vector<64x16xf32>
    %c0_81 = arith.constant 0 : index
    %c0_82 = arith.constant 0 : index
    %c1_83 = arith.constant 1 : index
    %c0_84 = arith.constant 0 : index
    %c1_85 = arith.constant 1 : index
    %c0_86 = arith.constant 0 : index
    %c0_87 = arith.constant 0 : index
    %55 = vector.load %arg4[%c0_81, %c0_82, %c1_83, %c0_84, %c1_85, %c0_86, %c0_87] : memref<1x1x2x8x2x8x16xf32, #tpu.memory_space<vmem>>, vector<1x1x1x8x1x8x16xf32>
    %56 = vector.shape_cast %55 : vector<1x1x1x8x1x8x16xf32> to vector<8x8x16xf32>
    %57 = vector.shape_cast %56 : vector<8x8x16xf32> to vector<64x16xf32>
    %cst_88 = arith.constant dense<0.000000e+00> : vector<64x16xf32>
    %58 = tpu.matmul %57, %3, %cst_88 {dimension_numbers = #tpu.dot_dimension_numbers<[1], [0], [0], [1], [0, 0, 1, 1], [], []>} : vector<64x16xf32>, vector<16x16xf32>, vector<64x16xf32> -> vector<64x16xf32>
    %59 = arith.addf %54, %58 : vector<64x16xf32>
    %c1_89 = arith.constant 1 : index
    %c1_90 = arith.constant 1 : index
    %c0_91 = arith.constant 0 : index
    %c0_92 = arith.constant 0 : index
    %60 = vector.load %arg7[%c1_89, %c1_90, %c0_91, %c0_92] : memref<2x2x1x16xf32, #tpu.memory_space<vmem>>, vector<1x1x1x16xf32>
    %61 = vector.shape_cast %60 : vector<1x1x1x16xf32> to vector<1x16xf32>
    %62 = vector.broadcast %61 : vector<1x16xf32> to vector<64x16xf32>
    %63 = arith.addf %59, %62 : vector<64x16xf32>
    %64 = vector.shape_cast %63 : vector<64x16xf32> to vector<8x8x16xf32>
    %c0_93 = arith.constant 0 : index
    %c0_94 = arith.constant 0 : index
    %c1_95 = arith.constant 1 : index
    %c0_96 = arith.constant 0 : index
    %c1_97 = arith.constant 1 : index
    %c0_98 = arith.constant 0 : index
    %c0_99 = arith.constant 0 : index
    %65 = vector.load %arg8[%c0_93, %c0_94, %c1_95, %c0_96, %c1_97, %c0_98, %c0_99] : memref<1x1x2x8x2x8x16xf32, #tpu.memory_space<vmem>>, vector<1x1x1x8x1x8x16xf32>
    %66 = vector.shape_cast %65 : vector<1x1x1x8x1x8x16xf32> to vector<8x8x16xf32>
    %67 = vector.shape_cast %64 : vector<8x8x16xf32> to vector<1x1x1x8x1x8x16xf32>
    tpu.vector_store %arg8[%c0_93, %c0_94, %c1_95, %c0_96, %c1_97, %c0_98, %c0_99], %67 {strides = array<i32>} : memref<1x1x2x8x2x8x16xf32, #tpu.memory_space<vmem>>, vector<1x1x1x8x1x8x16xf32>,
    return
  }
  func.func @transform_0(%arg0: i32, %arg1: i32, %arg2: i32) -> (i32, i32, i32, i32, i32) {
    %c0_i32 = arith.constant 0 : i32
    %c0_i32_0 = arith.constant 0 : i32
    %c0_i32_1 = arith.constant 0 : i32
    return %arg0, %arg1, %arg2, %c0_i32, %c0_i32_0 : i32, i32, i32, i32, i32
  }
  func.func @transform_1(%arg0: i32, %arg1: i32, %arg2: i32) -> (i32, i32, i32, i32, i32, i32, i32) {
    %c0_i32 = arith.constant 0 : i32
    %c0_i32_0 = arith.constant 0 : i32
    %c0_i32_1 = arith.constant 0 : i32
    %c0_i32_2 = arith.constant 0 : i32
    %c0_i32_3 = arith.constant 0 : i32
    return %arg0, %arg1, %c0_i32, %arg2, %c0_i32_0, %c0_i32_1, %c0_i32_2 : i32, i32, i32, i32, i32, i32, i32
  }
  func.func @transform_2(%arg0: i32, %arg1: i32, %arg2: i32) -> (i32, i32, i32, i32) {
    %c0_i32 = arith.constant 0 : i32
    %c0_i32_0 = arith.constant 0 : i32
    %c0_i32_1 = arith.constant 0 : i32
    %c0_i32_2 = arith.constant 0 : i32
    %c0_i32_3 = arith.constant 0 : i32
    return %c0_i32, %c0_i32_0, %c0_i32_1, %c0_i32_2 : i32, i32, i32, i32
  }
  func.func @transform_3(%arg0: i32, %arg1: i32, %arg2: i32) -> (i32, i32) {
    %c0_i32 = arith.constant 0 : i32
    %c0_i32_0 = arith.constant 0 : i32
    %c0_i32_1 = arith.constant 0 : i32
    return %c0_i32, %c0_i32_0 : i32, i32
  }
  func.func @transform_4(%arg0: i32, %arg1: i32, %arg2: i32) -> (i32, i32, i32, i32) {
    %c0_i32 = arith.constant 0 : i32
    %c0_i32_0 = arith.constant 0 : i32
    %c0_i32_1 = arith.constant 0 : i32
    %c0_i32_2 = arith.constant 0 : i32
    %c0_i32_3 = arith.constant 0 : i32
    return %c0_i32, %c0_i32_0, %c0_i32_1, %c0_i32_2 : i32, i32, i32, i32
  }
  func.func @transform_5(%arg0: i32, %arg1: i32, %arg2: i32) -> (i32, i32, i32, i32, i32, i32, i32) {
    %c0_i32 = arith.constant 0 : i32
    %c0_i32_0 = arith.constant 0 : i32
    %c0_i32_1 = arith.constant 0 : i32
    %c0_i32_2 = arith.constant 0 : i32
    %c0_i32_3 = arith.constant 0 : i32
    return %arg0, %arg1, %c0_i32, %arg2, %c0_i32_0, %c0_i32_1, %c0_i32_2 : i32, i32, i32, i32, i32, i32, i32
  }
}

</mosaic_0001>

<llo_original>
// kernel: tpu_custom_call.1
$region0: #{tpu_custom_call.1}
  #allocation0 [shape = 'u32[]', space=smem, size = 0x4, offset = 0x4, fixed_abs, tag = 'smem constant byte address 0x4 - core index']
  #allocation1 [shape = 'u32[144,128]{1,0:T(1,128)}', space=vmem, size = 0x12000, scoped, tag = 'internal scratch']
  %s0 = inlined_call_operand.hbm [shape: f32[2,8,8,8,16], index: 0, kind: input, shape index: {}]
  %s1 = inlined_call_operand.hbm [shape: f32[2,8,2,8,2,8,16], index: 1, kind: input, shape index: {}]
  %s2 = inlined_call_operand.hbm [shape: f32[2,2,16,16], index: 2, kind: input, shape index: {}]
  %s3 = inlined_call_operand.hbm [shape: f32[16,16], index: 3, kind: input, shape index: {}]
  %s4 = inlined_call_operand.hbm [shape: f32[2,2,1,16], index: 4, kind: input, shape index: {}]
  %s5 = inlined_call_operand.hbm [shape: f32[2,8,2,8,2,8,16], index: 5, kind: output, shape index: {}]
  %s6 = sld [smem:[#allocation0]]
  $region73: #{tpu_custom_call.1} parent=0
    _
  %s8 = ssub.s32 1, %s6
  %s9 = scalar_select 0, %s8, %s6
  $region1: #{tpu_custom_call.1} parent=0
    #allocation2 [shape = 'u8[65536]{0}', space=vmem, size = 0x10000, scoped, tag = 'input window, operand 0']
    #allocation3 [shape = 's32[2]{0}', space=sflag, size = 0x8, scoped, tag = 'scoped memory for tpu_custom_call.1']
    #allocation4 [shape = 's32[2]{0}', space=sflag, size = 0x8, scoped, tag = 'scoped memory for tpu_custom_call.1']
    #allocation5 [shape = 'u8[262144]{0}', space=vmem, size = 0x40000, scoped, tag = 'input window, operand 1']
    #allocation6 [shape = 's32[2]{0}', space=sflag, size = 0x8, scoped, tag = 'scoped memory for tpu_custom_call.1']
    #allocation7 [shape = 'u8[32768]{0}', space=vmem, size = 0x8000, scoped, tag = 'input window, operand 2, single buffered']
    #allocation8 [shape = 'u8[8192]{0}', space=vmem, size = 0x2000, scoped, tag = 'input window, operand 3, single buffered']
    #allocation9 [shape = 's32[1]{0}', space=sflag, size = 0x4, scoped, tag = 'scoped memory for tpu_custom_call.1']
    #allocation10 [shape = 'u8[2048]{0}', space=vmem, size = 0x800, scoped, tag = 'input window, operand 4, single buffered']
    #allocation11 [shape = 'u8[262144]{0}', space=vmem, size = 0x40000, scoped, tag = 'output window, operand 0']
    %10 = vsyncpa [#allocation3], 0
    %s11 = scalar_lea.sflag [#allocation3], 1
    %12 = vsyncpa %s11, 0
    %13 = vsyncpa [#allocation6], 0
    %s14 = scalar_lea.sflag [#allocation6], 1
    %15 = vsyncpa %s14, 0
    %16 = vsyncpa [#allocation9], 0
    %17 = vsyncpa [#allocation4], 0
    %s18 = scalar_lea.sflag [#allocation4], 1
    %19 = vsyncpa %s18, 0
    loop: start=0, step=1, limit=18
    $region2: #{tpu_custom_call.1} parent=1 // loop_pre_header
      _
    $region3: #{tpu_custom_call.1} parent=1 // loop_header
      %s21 = sphi 0, %s25
      %p22 = scmp.ge.s32.totalorder %s21, 18
      %s28 = sphi 0, %s47
      %s29 = sphi 0, %s43
      %s30 = sphi 0, %s39
      %s31 = sphi 0, %s28
      %s32 = sphi 0, %s29
      %s33 = sphi 0, %s30
      %s34 = sphi 0, %s31
      %s35 = sphi 0, %s32
      %s36 = sphi 0, %s33
      %s54 = sphi 0, %s56
      %s57 = sphi 0, %s54
      %s58 = sphi 0, %s57
      %s74 = sphi 0, %s58
      %s84 = sphi 0, %s86
      %s87 = sphi 0, %s84
      %s88 = sphi 0, %s87
      %s104 = sphi 0, %s88
      %s108 = sphi 0, %s108
      %s110 = sphi 0, %s108
      %s111 = sphi 0, %s110
      %s125 = sphi 0, %s111
      %s129 = sphi 0, %s129
      %s131 = sphi 0, %s129
      %s132 = sphi 0, %s131
      %s146 = sphi 0, %s132
      %s150 = sphi 0, %s150
      %s152 = sphi 0, %s150
      %s153 = sphi 0, %s152
      %s167 = sphi 0, %s153
      %s177 = sphi 0, %s179
      %s180 = sphi 0, %s177
      %s181 = sphi 0, %s180
      %s197 = sphi 0, %s181
    $region4: #{tpu_custom_call.1} parent=1 // loop_header_branch
      %24 = sbr.rel (%p22) target = $region8
    $region5: #{tpu_custom_call.1} parent=1 // loop_body
      %s26 = ssub.s32 %s21, 1
      %s27 = ssub.s32 %s21, 2
      %s37 = sadd.s32 1, %s30
      %p38 = scmp.ge.s32.totalorder %s37, 1
      %s39 = scalar_select %p38, 0, %s37
      %s40 = sadd.s32 1, %s29
      %s41 = scalar_select %p38, %s40, %s29
      %p42 = scmp.ge.s32.totalorder %s41, 8
      %s43 = scalar_select %p42, 0, %s41
      %s44 = sadd.s32 1, %s28
      %s45 = scalar_select %p42, %s44, %s28
      %p46 = scmp.ge.s32.totalorder %s45, 2
      %s47 = scalar_select %p46, 0, %s45
      %s48 = ssub.s32 %s28, %s47
      %s49 = ssub.s32 %s29, %s43
      %s50 = sor.u32 %s48, %s49
      %s51 = ssub.s32 %s30, %s39
      %s52 = sor.u32 %s50, %s51
      %p53 = scmp.eq.s32.totalorder %s52, 0
      %s55 = sadd.s32 %s54, 1
      %s56 = scalar_select %p53, %s54, %s55
      %p59 = pneg %p53
      %p60 = scmp.eq.s32.totalorder %s21, 15
      %p61 = por %p59, %p60
      %p62 = scmp.ne.s32.totalorder %s54, %s57
      %p63 = scmp.eq.s32.totalorder %s21, 0
      %p64 = por %p62, %p63
      %p65 = scmp.ne.s32.totalorder %s54, %s57
      %p66 = scmp.eq.s32.totalorder %s26, 15
      %p67 = por %p65, %p66
      %p68 = scmp.ne.s32.totalorder %s57, %s58
      %p69 = scmp.eq.s32.totalorder %s26, 0
      %p70 = por %p68, %p69
      %p71 = scmp.ne.s32.totalorder %s57, %s58
      %p72 = scmp.eq.s32.totalorder %s27, 15
      %p73 = por %p71, %p72
      %p75 = scmp.ne.s32.totalorder %s58, %s74
      %p76 = scmp.eq.s32.totalorder %s27, 0
      %p77 = por %p75, %p76
      %s78 = ssub.s32 %s28, %s47
      %s79 = ssub.s32 %s29, %s43
      %s80 = sor.u32 %s78, %s79
      %s81 = ssub.s32 %s30, %s39
      %s82 = sor.u32 %s80, %s81
      %p83 = scmp.eq.s32.totalorder %s82, 0
      %s85 = sadd.s32 %s84, 1
      %s86 = scalar_select %p83, %s84, %s85
      %p89 = pneg %p83
      %p90 = scmp.eq.s32.totalorder %s21, 15
      %p91 = por %p89, %p90
      %p92 = scmp.ne.s32.totalorder %s84, %s87
      %p93 = scmp.eq.s32.totalorder %s21, 0
      %p94 = por %p92, %p93
      %p95 = scmp.ne.s32.totalorder %s84, %s87
      %p96 = scmp.eq.s32.totalorder %s26, 15
      %p97 = por %p95, %p96
      %p98 = scmp.ne.s32.totalorder %s87, %s88
      %p99 = scmp.eq.s32.totalorder %s26, 0
      %p100 = por %p98, %p99
      %p101 = scmp.ne.s32.totalorder %s87, %s88
      %p102 = scmp.eq.s32.totalorder %s27, 15
      %p103 = por %p101, %p102
      %p105 = scmp.ne.s32.totalorder %s88, %s104
      %p106 = scmp.eq.s32.totalorder %s27, 0
      %p107 = por %p105, %p106
      %s109 = sadd.s32 %s108, 1
      %p112 = scmp.eq.s32.totalorder %s21, 15
      %p113 = scmp.ne.s32.totalorder %s108, %s110
      %p114 = scmp.eq.s32.totalorder %s21, 0
      %p115 = por %p113, %p114
      %p116 = scmp.ne.s32.totalorder %s108, %s110
      %p117 = scmp.eq.s32.totalorder %s26, 15
      %p118 = por %p116, %p117
      %p119 = scmp.ne.s32.totalorder %s110, %s111
      %p120 = scmp.eq.s32.totalorder %s26, 0
      %p121 = por %p119, %p120
      %p122 = scmp.ne.s32.totalorder %s110, %s111
      %p123 = scmp.eq.s32.totalorder %s27, 15
      %p124 = por %p122, %p123
      %p126 = scmp.ne.s32.totalorder %s111, %s125
      %p127 = scmp.eq.s32.totalorder %s27, 0
      %p128 = por %p126, %p127
      %s130 = sadd.s32 %s129, 1
      %p133 = scmp.eq.s32.totalorder %s21, 15
      %p134 = scmp.ne.s32.totalorder %s129, %s131
      %p135 = scmp.eq.s32.totalorder %s21, 0
      %p136 = por %p134, %p135
      %p137 = scmp.ne.s32.totalorder %s129, %s131
      %p138 = scmp.eq.s32.totalorder %s26, 15
      %p139 = por %p137, %p138
      %p140 = scmp.ne.s32.totalorder %s131, %s132
      %p141 = scmp.eq.s32.totalorder %s26, 0
      %p142 = por %p140, %p141
      %p143 = scmp.ne.s32.totalorder %s131, %s132
      %p144 = scmp.eq.s32.totalorder %s27, 15
      %p145 = por %p143, %p144
      %p147 = scmp.ne.s32.totalorder %s132, %s146
      %p148 = scmp.eq.s32.totalorder %s27, 0
      %p149 = por %p147, %p148
      %s151 = sadd.s32 %s150, 1
      %p154 = scmp.eq.s32.totalorder %s21, 15
      %p155 = scmp.ne.s32.totalorder %s150, %s152
      %p156 = scmp.eq.s32.totalorder %s21, 0
      %p157 = por %p155, %p156
      %p158 = scmp.ne.s32.totalorder %s150, %s152
      %p159 = scmp.eq.s32.totalorder %s26, 15
      %p160 = por %p158, %p159
      %p161 = scmp.ne.s32.totalorder %s152, %s153
      %p162 = scmp.eq.s32.totalorder %s26, 0
      %p163 = por %p161, %p162
      %p164 = scmp.ne.s32.totalorder %s152, %s153
      %p165 = scmp.eq.s32.totalorder %s27, 15
      %p166 = por %p164, %p165
      %p168 = scmp.ne.s32.totalorder %s153, %s167
      %p169 = scmp.eq.s32.totalorder %s27, 0
      %p170 = por %p168, %p169
      %s171 = ssub.s32 %s28, %s47
      %s172 = ssub.s32 %s29, %s43
      %s173 = sor.u32 %s171, %s172
      %s174 = ssub.s32 %s30, %s39
      %s175 = sor.u32 %s173, %s174
      %p176 = scmp.eq.s32.totalorder %s175, 0
      %s178 = sadd.s32 %s177, 1
      %s179 = scalar_select %p176, %s177, %s178
      %p182 = pneg %p176
      %p183 = scmp.eq.s32.totalorder %s21, 15
      %p184 = por %p182, %p183
      %p185 = scmp.ne.s32.totalorder %s177, %s180
      %p186 = scmp.eq.s32.totalorder %s21, 0
      %p187 = por %p185, %p186
      %p188 = scmp.ne.s32.totalorder %s177, %s180
      %p189 = scmp.eq.s32.totalorder %s26, 15
      %p190 = por %p188, %p189
      %p191 = scmp.ne.s32.totalorder %s180, %s181
      %p192 = scmp.eq.s32.totalorder %s26, 0
      %p193 = por %p191, %p192
      %p194 = scmp.ne.s32.totalorder %s180, %s181
      %p195 = scmp.eq.s32.totalorder %s27, 15
      %p196 = por %p194, %p195
      %p198 = scmp.ne.s32.totalorder %s181, %s197
      %p199 = scmp.eq.s32.totalorder %s27, 0
      %p200 = por %p198, %p199
      %p201 = scmp.le.s32.totalorder 1, %s21
      %p202 = scmp.lt.s32.totalorder %s21, 17
      %p203 = pnand %p201, %p202
      %p204 = pneg %p203
      // Predicated region
      $region9: #{tpu_custom_call.1} parent=5 // pred_check
        _
      $region10: #{tpu_custom_call.1} parent=5 // pred_check_branch
        %206 = sbr.rel (%p203) target = $region12
      $region11: #{tpu_custom_call.1} parent=5 // pred_region
        %s207 = ssub.s32 %s21, 1
        // Predicated region
        $region13: #{tpu_custom_call.1} parent=11 // pred_check
          %p208 = pneg %p121
        $region14: #{tpu_custom_call.1} parent=11 // pred_check_branch
          %210 = sbr.rel (%p208) target = $region16
        $region15: #{tpu_custom_call.1} parent=11 // pred_region
          %s212 = ssub.s32 1024, 1024
          %213 = vsyncadd [#allocation6], %s212
          %s214 = sshll.u32 [#allocation7], 4
          %s215 = int_to_ptr.vmem [resolvable:$true] %s214
          %220 = dma.hbm_to_vmem [thread:$0]  %s2, 1024, %s215, [#allocation6], 128, 128, 8
        $region16: #{tpu_custom_call.1} parent=11 // pred_fallthru
          _
        // Predicated region
        $region17: #{tpu_custom_call.1} parent=11 // pred_check
          %p221 = pneg %p142
        $region18: #{tpu_custom_call.1} parent=11 // pred_check_branch
          %223 = sbr.rel (%p221) target = $region20
        $region19: #{tpu_custom_call.1} parent=11 // pred_region
          %s225 = ssub.s32 256, 256
          %226 = vsyncadd [#allocation9], %s225
          %s227 = sshll.u32 [#allocation8], 4
          %s228 = int_to_ptr.vmem [resolvable:$true] %s227
          %233 = dma.hbm_to_vmem [thread:$0]  %s3, 256, %s228, [#allocation9], 128, 128, 8
        $region20: #{tpu_custom_call.1} parent=11 // pred_fallthru
          _
        // Predicated region
        $region21: #{tpu_custom_call.1} parent=11 // pred_check
          %p234 = pneg %p163
        $region22: #{tpu_custom_call.1} parent=11 // pred_check_branch
          %236 = sbr.rel (%p234) target = $region24
        $region23: #{tpu_custom_call.1} parent=11 // pred_region
          %s238 = ssub.s32 64, 64
          %239 = vsyncadd [#allocation9], %s238
          %s240 = sshll.u32 [#allocation10], 4
          %s241 = int_to_ptr.vmem [resolvable:$true] %s240
          %246 = dma.hbm_to_vmem [thread:$0]  %s4, 64, %s241, [#allocation9], 16, 16, 1
        $region24: #{tpu_custom_call.1} parent=11 // pred_fallthru
          _
      $region12: #{tpu_custom_call.1} parent=5 // pred_fallthru
        _
      %p247 = scmp.lt.s32.totalorder %s21, 16
      // Predicated region
      $region25: #{tpu_custom_call.1} parent=5 // pred_check
        %p248 = pneg %p247
      $region26: #{tpu_custom_call.1} parent=5 // pred_check_branch
        %250 = sbr.rel (%p248) target = $region28
      $region27: #{tpu_custom_call.1} parent=5 // pred_region
        // Predicated region
        $region29: #{tpu_custom_call.1} parent=27 // pred_check
          %p251 = pneg %p64
        $region30: #{tpu_custom_call.1} parent=27 // pred_check_branch
          %253 = sbr.rel (%p251) target = $region32
        $region31: #{tpu_custom_call.1} parent=27 // pred_region
          %s254 = sand.u32 %s54, 1
          %s255 = scalar_lea.sflag [#allocation3], %s254
          %s256 = sand.u32 %s54, 1
          %s257 = smul.addr %s256, 64
          %s258 = scalar_lea.vmem [#allocation2], %s257
          %s259 = smul.u32 8, %s30
          %s261 = ssub.s32 1024, 1024
          %262 = vsyncadd %s255, %s261
          %s263 = smul.addr %s29, 8
          %s264 = sadd.s32 %s259, %s263
          %s265 = smul.addr %s28, 64
          %s266 = sadd.s32 %s264, %s265
          %s267 = smul.addr %s266, 128
          %s268 = scalar_lea.hbm %s0, %s267
          %s269 = sshll.u32 %s258, 4
          %s270 = int_to_ptr.vmem [resolvable:$true] %s269
          %275 = dma.hbm_to_vmem [thread:$0]  %s268, 1024, %s270, %s255, 128, 128, 8
        $region32: #{tpu_custom_call.1} parent=27 // pred_fallthru
          _
        // Predicated region
        $region33: #{tpu_custom_call.1} parent=27 // pred_check
          %p276 = pneg %p94
        $region34: #{tpu_custom_call.1} parent=27 // pred_check_branch
          %278 = sbr.rel (%p276) target = $region36
        $region35: #{tpu_custom_call.1} parent=27 // pred_region
          %s279 = sand.u32 %s21, 1
          %s280 = scalar_lea.sflag [#allocation6], %s279
          %s281 = sand.u32 %s84, 1
          %s282 = smul.addr %s281, 256
          %s283 = scalar_lea.vmem [#allocation5], %s282
          %s284 = smul.u32 8, %s30
          %s286 = ssub.s32 4096, 4096
          %287 = vsyncadd %s280, %s286
          %s288 = smul.addr %s284, 2
          %s289 = smul.addr %s29, 32
          %s290 = sadd.s32 %s288, %s289
          %s291 = smul.addr %s28, 256
          %s292 = sadd.s32 %s290, %s291
          %s293 = smul.addr %s292, 128
          %s294 = scalar_lea.hbm %s1, %s293
          %s295 = sshll.u32 %s283, 4
          %s296 = int_to_ptr.vmem [resolvable:$true] %s295
          %301 = dma.hbm_to_vmem [thread:$0]  %s294, 4096, %s296, %s280, 128, 128, 8
        $region36: #{tpu_custom_call.1} parent=27 // pred_fallthru
          _
      $region28: #{tpu_custom_call.1} parent=5 // pred_fallthru
        _
      %p302 = scmp.le.s32.totalorder 1, %s21
      %p303 = scmp.lt.s32.totalorder %s21, 17
      %p304 = pnand %p302, %p303
      %p305 = pneg %p304
      // Predicated region
      $region37: #{tpu_custom_call.1} parent=5 // pred_check
        _
      $region38: #{tpu_custom_call.1} parent=5 // pred_check_branch
        %307 = sbr.rel (%p304) target = $region40
      $region39: #{tpu_custom_call.1} parent=5 // pred_region
        %s308 = ssub.s32 %s21, 1
        %s309 = sand.u32 %s57, 1
        %s310 = scalar_lea.sflag [#allocation3], %s309
        %s311 = sand.u32 %s57, 1
        %s312 = smul.addr %s311, 64
        %s313 = scalar_lea.vmem [#allocation2], %s312
        // Predicated region
        $region41: #{tpu_custom_call.1} parent=39 // pred_check
          %p314 = pneg %p70
        $region42: #{tpu_custom_call.1} parent=39 // pred_check_branch
          %316 = sbr.rel (%p314) target = $region44
        $region43: #{tpu_custom_call.1} parent=39 // pred_region
          %317 = dma.done %s310, 1024
        $region44: #{tpu_custom_call.1} parent=39 // pred_fallthru
          _
        %s318 = sand.u32 %s26, 1
        %s319 = scalar_lea.sflag [#allocation6], %s318
        %s320 = sand.u32 %s87, 1
        %s321 = smul.addr %s320, 256
        %s322 = scalar_lea.vmem [#allocation5], %s321
        // Predicated region
        $region45: #{tpu_custom_call.1} parent=39 // pred_check
          %p323 = pneg %p100
        $region46: #{tpu_custom_call.1} parent=39 // pred_check_branch
          %325 = sbr.rel (%p323) target = $region48
        $region47: #{tpu_custom_call.1} parent=39 // pred_region
          %326 = dma.done %s319, 4096
        $region48: #{tpu_custom_call.1} parent=39 // pred_fallthru
          _
        // Predicated region
        $region49: #{tpu_custom_call.1} parent=39 // pred_check
          %p327 = pneg %p121
        $region50: #{tpu_custom_call.1} parent=39 // pred_check_branch
          %329 = sbr.rel (%p327) target = $region52
        $region51: #{tpu_custom_call.1} parent=39 // pred_region
          %330 = dma.done [#allocation6], 1024
        $region52: #{tpu_custom_call.1} parent=39 // pred_fallthru
          _
        // Predicated region
        $region53: #{tpu_custom_call.1} parent=39 // pred_check
          %p331 = pneg %p142
        $region54: #{tpu_custom_call.1} parent=39 // pred_check_branch
          %333 = sbr.rel (%p331) target = $region56
        $region55: #{tpu_custom_call.1} parent=39 // pred_region
          %334 = dma.done [#allocation9], 256
        $region56: #{tpu_custom_call.1} parent=39 // pred_fallthru
          _
        // Predicated region
        $region57: #{tpu_custom_call.1} parent=39 // pred_check
          %p335 = pneg %p163
        $region58: #{tpu_custom_call.1} parent=39 // pred_check_branch
          %337 = sbr.rel (%p335) target = $region60
        $region59: #{tpu_custom_call.1} parent=39 // pred_region
          %338 = dma.done [#allocation9], 64
        $region60: #{tpu_custom_call.1} parent=39 // pred_fallthru
          _
        %s339 = sand.u32 %s57, 1
        %s340 = scalar_lea.sflag [#allocation3], %s339
        %s341 = sand.u32 %s57, 1
        %s342 = smul.addr %s341, 64
        %s343 = scalar_lea.vmem [#allocation2], %s342
        %p344 = pneg %p70
        %p345 = pneg %p67
        %s346 = sand.u32 %s26, 1
        %s347 = scalar_lea.sflag [#allocation6], %s346
        %s348 = sand.u32 %s87, 1
        %s349 = smul.addr %s348, 256
        %s350 = scalar_lea.vmem [#allocation5], %s349
        %p351 = pneg %p100
        %p352 = pneg %p97
        %p353 = pneg %p121
        %p354 = pneg %p118
        %p355 = pneg %p142
        %p356 = pneg %p139
        %p357 = pneg %p163
        %p358 = pneg %p160
        %p359 = pneg %p193
        %p360 = pneg %p190
        %s361 = sand.u32 %s180, 1
        %s362 = scalar_lea.sflag [#allocation4], %s361
        %s363 = sand.u32 %s180, 1
        %s364 = smul.addr %s363, 256
        %s365 = scalar_lea.vmem [#allocation11], %s364
        %s366 = smul.u32 8, %s33
        %s367 = smul.u32 8, %s33
        %s368 = smul.u32 8, %s33
        %v369 = vld [vmem:[%s313] sm:$0xff]
        %v370 = vld [vmem:[%s313 + $0x8] sm:$0xff]
        %v371 = vld [vmem:[%s313 + $0x10] sm:$0xff]
        %v372 = vld [vmem:[%s313 + $0x18] sm:$0xff]
        %v373 = vld [vmem:[%s313 + $0x20] sm:$0xff]
        %v374 = vld [vmem:[%s313 + $0x28] sm:$0xff]
        %v375 = vld [vmem:[%s313 + $0x30] sm:$0xff]
        %v376 = vld [vmem:[%s313 + $0x38] sm:$0xff]
        %v377 = vld [vmem:[#allocation8] sm:$0xff]
        %v378 = vld [vmem:[#allocation8 + $0x8] sm:$0xff]
        %v379 = vld [vmem:[#allocation7] sm:$0xff]
        %v380 = vld [vmem:[#allocation7 + $0x8] sm:$0xff]
        %v381 = vld [vmem:[%s322] sm:$0xff]
        %v382 = vld [vmem:[%s322 + $0x10] sm:$0xff]
        %v383 = vld [vmem:[%s322 + $0x20] sm:$0xff]
        %v384 = vld [vmem:[%s322 + $0x30] sm:$0xff]
        %v385 = vld [vmem:[%s322 + $0x40] sm:$0xff]
        %v386 = vld [vmem:[%s322 + $0x50] sm:$0xff]
        %v387 = vld [vmem:[%s322 + $0x60] sm:$0xff]
        %v388 = vld [vmem:[%s322 + $0x70] sm:$0xff]
        %vm389 = vcmask 130048
        %v391 = vsel %vm389, %v381, 0
        %v394 = vsel %vm389, %v382, 0
        %v397 = vsel %vm389, %v383, 0
        %v400 = vsel %vm389, %v384, 0
        %v403 = vsel %vm389, %v385, 0
        %v406 = vsel %vm389, %v386, 0
        %v409 = vsel %vm389, %v387, 0
        %v412 = vsel %vm389, %v388, 0
        %414 = vmatprep.subr.mxu0 0.0
        %415 = vmatpush1.msra.mxu0 0.0
        %416 = vmatprep.subr.mxu0 0.0
        %417 = vmatpush1.msra.mxu0 0.0
        %418 = vmatprep.subr.mxu0 0.0
        %419 = vmatpush1.msra.mxu0 0.0
        %420 = vmatprep.subr.mxu0 0.0
        %421 = vmatpush1.msra.mxu0 0.0
        %422 = vmatprep.subr.mxu0 0.0
        %423 = vmatpush1.msra.mxu0 0.0
        %424 = vmatprep.subr.mxu0 0.0
        %425 = vmatpush1.msra.mxu0 0.0
        %426 = vmatprep.subr.mxu0 0.0
        %427 = vmatpush1.msra.mxu0 0.0
        %428 = vmatprep.subr.mxu0 0.0
        %429 = vmatpush1.msra.mxu0 0.0
        %430 = vmatprep.subr.mxu0 0.0
        %431 = vmatpush1.msra.mxu0 0.0
        %432 = vmatprep.subr.mxu0 0.0
        %433 = vmatpush1.msra.mxu0 0.0
        %434 = vmatprep.subr.mxu0 0.0
        %435 = vmatpush1.msra.mxu0 0.0
        %436 = vmatprep.subr.mxu0 0.0
        %437 = vmatpush1.msra.mxu0 0.0
        %438 = vmatprep.subr.mxu0 0.0
        %439 = vmatpush1.msra.mxu0 0.0
        %440 = vmatprep.subr.mxu0 0.0
        %441 = vmatpush1.msra.mxu0 0.0
        %442 = vmatprep.subr.mxu0 0.0
        %443 = vmatpush1.msra.mxu0 %v378
        %444 = vmatprep.subr.mxu0 0.0
        %445 = vmatpush1.msra.mxu0 %v377
        %446 = vmatprep.subr.mxu0 0.0
        %447 = vmatpush2.msra.mxu0 0.0
        %448 = vmatprep.subr.mxu0 0.0
        %449 = vmatpush2.msra.mxu0 0.0
        %450 = vmatprep.subr.mxu0 0.0
        %451 = vmatpush2.msra.mxu0 0.0
        %452 = vmatprep.subr.mxu0 0.0
        %453 = vmatpush2.msra.mxu0 0.0
        %454 = vmatprep.subr.mxu0 0.0
        %455 = vmatpush2.msra.mxu0 0.0
        %456 = vmatprep.subr.mxu0 0.0
        %457 = vmatpush2.msra.mxu0 0.0
        %458 = vmatprep.subr.mxu0 0.0
        %459 = vmatpush2.msra.mxu0 0.0
        %460 = vmatprep.subr.mxu0 0.0
        %461 = vmatpush2.msra.mxu0 0.0
        %462 = vmatprep.subr.mxu0 0.0
        %463 = vmatpush2.msra.mxu0 0.0
        %464 = vmatprep.subr.mxu0 0.0
        %465 = vmatpush2.msra.mxu0 0.0
        %466 = vmatprep.subr.mxu0 0.0
        %467 = vmatpush2.msra.mxu0 0.0
        %468 = vmatprep.subr.mxu0 0.0
        %469 = vmatpush2.msra.mxu0 0.0
        %470 = vmatprep.subr.mxu0 0.0
        %471 = vmatpush2.msra.mxu0 0.0
        %472 = vmatprep.subr.mxu0 0.0
        %473 = vmatpush2.msra.mxu0 0.0
        %474 = vmatprep.subr.mxu0 0.0
        %475 = vmatpush2.msra.mxu0 0.0
        %476 = vmatprep.subr.mxu0 0.0
        %477 = vmatpush2.msra.mxu0 0.0
        %478 = vmatprep.mubr.f32.mxu0 0.0
        %479 = vmatmul.mubr.f32.gmra.mxu0 %v391
        %v480 = vpop.f32.mrf.mxu0
        %v481 = vadd.f32 0.0, %v480
        %v482 = vpop.f32.mrf.mxu0
        %483 = vmatprep.mubr.f32.mxu0 0.0
        %484 = vmatmul.mubr.f32.gmra.mxu0 %v394
        %v485 = vpop.f32.mrf.mxu0
        %v486 = vadd.f32 0.0, %v485
        %v487 = vpop.f32.mrf.mxu0
        %488 = vmatprep.mubr.f32.mxu0 0.0
        %489 = vmatmul.mubr.f32.gmra.mxu0 %v397
        %v490 = vpop.f32.mrf.mxu0
        %v491 = vadd.f32 0.0, %v490
        %v492 = vpop.f32.mrf.mxu0
        %493 = vmatprep.mubr.f32.mxu0 0.0
        %494 = vmatmul.mubr.f32.gmra.mxu0 %v400
        %v495 = vpop.f32.mrf.mxu0
        %v496 = vadd.f32 0.0, %v495
        %v497 = vpop.f32.mrf.mxu0
        %498 = vmatprep.mubr.f32.mxu0 0.0
        %499 = vmatmul.mubr.f32.gmra.mxu0 %v403
        %v500 = vpop.f32.mrf.mxu0
        %v501 = vadd.f32 0.0, %v500
        %v502 = vpop.f32.mrf.mxu0
        %503 = vmatprep.mubr.f32.mxu0 0.0
        %504 = vmatmul.mubr.f32.gmra.mxu0 %v406
        %v505 = vpop.f32.mrf.mxu0
        %v506 = vadd.f32 0.0, %v505
        %v507 = vpop.f32.mrf.mxu0
        %508 = vmatprep.mubr.f32.mxu0 0.0
        %509 = vmatmul.mubr.f32.gmra.mxu0 %v409
        %v510 = vpop.f32.mrf.mxu0
        %v511 = vadd.f32 0.0, %v510
        %v512 = vpop.f32.mrf.mxu0
        %513 = vmatprep.mubr.f32.mxu0 0.0
        %514 = vmatmul.mubr.f32.gmra.mxu0 %v412
        %v515 = vpop.f32.mrf.mxu0
        %v516 = vadd.f32 0.0, %v515
        %v517 = vpop.f32.mrf.mxu0
        %518 = vdwg.mxu0
        %v520 = vsel %vm389, %v369, 0
        %v523 = vsel %vm389, %v370, 0
        %v526 = vsel %vm389, %v371, 0
        %v529 = vsel %vm389, %v372, 0
        %v532 = vsel %vm389, %v373, 0
        %v535 = vsel %vm389, %v374, 0
        %v538 = vsel %vm389, %v375, 0
        %v541 = vsel %vm389, %v376, 0
        %543 = vmatprep.subr.mxu0 0.0
        %544 = vmatpush1.msra.mxu0 0.0
        %545 = vmatprep.subr.mxu0 0.0
        %546 = vmatpush1.msra.mxu0 0.0
        %547 = vmatprep.subr.mxu0 0.0
        %548 = vmatpush1.msra.mxu0 0.0
        %549 = vmatprep.subr.mxu0 0.0
        %550 = vmatpush1.msra.mxu0 0.0
        %551 = vmatprep.subr.mxu0 0.0
        %552 = vmatpush1.msra.mxu0 0.0
        %553 = vmatprep.subr.mxu0 0.0
        %554 = vmatpush1.msra.mxu0 0.0
        %555 = vmatprep.subr.mxu0 0.0
        %556 = vmatpush1.msra.mxu0 0.0
        %557 = vmatprep.subr.mxu0 0.0
        %558 = vmatpush1.msra.mxu0 0.0
        %559 = vmatprep.subr.mxu0 0.0
        %560 = vmatpush1.msra.mxu0 0.0
        %561 = vmatprep.subr.mxu0 0.0
        %562 = vmatpush1.msra.mxu0 0.0
        %563 = vmatprep.subr.mxu0 0.0
        %564 = vmatpush1.msra.mxu0 0.0
        %565 = vmatprep.subr.mxu0 0.0
        %566 = vmatpush1.msra.mxu0 0.0
        %567 = vmatprep.subr.mxu0 0.0
        %568 = vmatpush1.msra.mxu0 0.0
        %569 = vmatprep.subr.mxu0 0.0
        %570 = vmatpush1.msra.mxu0 0.0
        %571 = vmatprep.subr.mxu0 0.0
        %572 = vmatpush1.msra.mxu0 %v380
        %573 = vmatprep.subr.mxu0 0.0
        %574 = vmatpush1.msra.mxu0 %v379
        %575 = vmatprep.subr.mxu0 0.0
        %576 = vmatpush2.msra.mxu0 0.0
        %577 = vmatprep.subr.mxu0 0.0
        %578 = vmatpush2.msra.mxu0 0.0
        %579 = vmatprep.subr.mxu0 0.0
        %580 = vmatpush2.msra.mxu0 0.0
        %581 = vmatprep.subr.mxu0 0.0
        %582 = vmatpush2.msra.mxu0 0.0
        %583 = vmatprep.subr.mxu0 0.0
        %584 = vmatpush2.msra.mxu0 0.0
        %585 = vmatprep.subr.mxu0 0.0
        %586 = vmatpush2.msra.mxu0 0.0
        %587 = vmatprep.subr.mxu0 0.0
        %588 = vmatpush2.msra.mxu0 0.0
        %589 = vmatprep.subr.mxu0 0.0
        %590 = vmatpush2.msra.mxu0 0.0
        %591 = vmatprep.subr.mxu0 0.0
        %592 = vmatpush2.msra.mxu0 0.0
        %593 = vmatprep.subr.mxu0 0.0
        %594 = vmatpush2.msra.mxu0 0.0
        %595 = vmatprep.subr.mxu0 0.0
        %596 = vmatpush2.msra.mxu0 0.0
        %597 = vmatprep.subr.mxu0 0.0
        %598 = vmatpush2.msra.mxu0 0.0
        %599 = vmatprep.subr.mxu0 0.0
        %600 = vmatpush2.msra.mxu0 0.0
        %601 = vmatprep.subr.mxu0 0.0
        %602 = vmatpush2.msra.mxu0 0.0
        %603 = vmatprep.subr.mxu0 0.0
        %604 = vmatpush2.msra.mxu0 0.0
        %605 = vmatprep.subr.mxu0 0.0
        %606 = vmatpush2.msra.mxu0 0.0
        %607 = vmatprep.mubr.f32.mxu0 0.0
        %608 = vmatmul.mubr.f32.gmra.mxu0 %v520
        %v609 = vpop.f32.mrf.mxu0
        %v610 = vadd.f32 %v481, %v609
        %v611 = vpop.f32.mrf.mxu0
        %612 = vmatprep.mubr.f32.mxu0 0.0
        %613 = vmatmul.mubr.f32.gmra.mxu0 %v523
        %v614 = vpop.f32.mrf.mxu0
        %v615 = vadd.f32 %v486, %v614
        %v616 = vpop.f32.mrf.mxu0
        %617 = vmatprep.mubr.f32.mxu0 0.0
        %618 = vmatmul.mubr.f32.gmra.mxu0 %v526
        %v619 = vpop.f32.mrf.mxu0
        %v620 = vadd.f32 %v491, %v619
        %v621 = vpop.f32.mrf.mxu0
        %622 = vmatprep.mubr.f32.mxu0 0.0
        %623 = vmatmul.mubr.f32.gmra.mxu0 %v529
        %v624 = vpop.f32.mrf.mxu0
        %v625 = vadd.f32 %v496, %v624
        %v626 = vpop.f32.mrf.mxu0
        %627 = vmatprep.mubr.f32.mxu0 0.0
        %628 = vmatmul.mubr.f32.gmra.mxu0 %v532
        %v629 = vpop.f32.mrf.mxu0
        %v630 = vadd.f32 %v501, %v629
        %v631 = vpop.f32.mrf.mxu0
        %632 = vmatprep.mubr.f32.mxu0 0.0
        %633 = vmatmul.mubr.f32.gmra.mxu0 %v535
        %v634 = vpop.f32.mrf.mxu0
        %v635 = vadd.f32 %v506, %v634
        %v636 = vpop.f32.mrf.mxu0
        %637 = vmatprep.mubr.f32.mxu0 0.0
        %638 = vmatmul.mubr.f32.gmra.mxu0 %v538
        %v639 = vpop.f32.mrf.mxu0
        %v640 = vadd.f32 %v511, %v639
        %v641 = vpop.f32.mrf.mxu0
        %642 = vmatprep.mubr.f32.mxu0 0.0
        %643 = vmatmul.mubr.f32.gmra.mxu0 %v541
        %v644 = vpop.f32.mrf.mxu0
        %v645 = vadd.f32 %v516, %v644
        %v646 = vpop.f32.mrf.mxu0
        %647 = vdwg.mxu0
        %v648 = vld [vmem:[#allocation10] sm:$0x1]
        %v650 = vlaneseq
        %v651 = vshrl.u32 %v650, 7
        %v652 = vsub.s32 0, %v651
        %v653 = vrot.slane %v648, %v652
        %v655 = vadd.f32 %v610, %v653
        %v656 = vadd.f32 %v615, %v653
        %v657 = vadd.f32 %v620, %v653
        %v658 = vadd.f32 %v625, %v653
        %v659 = vadd.f32 %v630, %v653
        %v660 = vadd.f32 %v635, %v653
        %v661 = vadd.f32 %v640, %v653
        %v662 = vadd.f32 %v645, %v653
        %663 = vst.msk [vmem:[%s365] sm:$0xff] %vm389, %v655
        %664 = vst.msk [vmem:[%s365 + $0x10] sm:$0xff] %vm389, %v656
        %665 = vst.msk [vmem:[%s365 + $0x20] sm:$0xff] %vm389, %v657
        %666 = vst.msk [vmem:[%s365 + $0x30] sm:$0xff] %vm389, %v658
        %667 = vst.msk [vmem:[%s365 + $0x40] sm:$0xff] %vm389, %v659
        %668 = vst.msk [vmem:[%s365 + $0x50] sm:$0xff] %vm389, %v660
        %669 = vst.msk [vmem:[%s365 + $0x60] sm:$0xff] %vm389, %v661
        %670 = vst.msk [vmem:[%s365 + $0x70] sm:$0xff] %vm389, %v662
        %s671 = scalar_lea.vmem [#allocation7], 16
        %v672 = vld [vmem:[%s671] sm:$0xff]
        %v673 = vld [vmem:[%s671 + $0x8] sm:$0xff]
        %s674 = scalar_lea.vmem %s322, 8 [#allocation5]
        %v675 = vld [vmem:[%s674] sm:$0xff]
        %v676 = vld [vmem:[%s674 + $0x10] sm:$0xff]
        %v677 = vld [vmem:[%s674 + $0x20] sm:$0xff]
        %v678 = vld [vmem:[%s674 + $0x30] sm:$0xff]
        %v679 = vld [vmem:[%s674 + $0x40] sm:$0xff]
        %v680 = vld [vmem:[%s674 + $0x50] sm:$0xff]
        %v681 = vld [vmem:[%s674 + $0x60] sm:$0xff]
        %v682 = vld [vmem:[%s674 + $0x70] sm:$0xff]
        %v684 = vsel %vm389, %v675, 0
        %v687 = vsel %vm389, %v676, 0
        %v690 = vsel %vm389, %v677, 0
        %v693 = vsel %vm389, %v678, 0
        %v696 = vsel %vm389, %v679, 0
        %v699 = vsel %vm389, %v680, 0
        %v702 = vsel %vm389, %v681, 0
        %v705 = vsel %vm389, %v682, 0
        %707 = vmatprep.subr.mxu0 0.0
        %708 = vmatpush1.msra.mxu0 0.0
        %709 = vmatprep.subr.mxu0 0.0
        %710 = vmatpush1.msra.mxu0 0.0
        %711 = vmatprep.subr.mxu0 0.0
        %712 = vmatpush1.msra.mxu0 0.0
        %713 = vmatprep.subr.mxu0 0.0
        %714 = vmatpush1.msra.mxu0 0.0
        %715 = vmatprep.subr.mxu0 0.0
        %716 = vmatpush1.msra.mxu0 0.0
        %717 = vmatprep.subr.mxu0 0.0
        %718 = vmatpush1.msra.mxu0 0.0
        %719 = vmatprep.subr.mxu0 0.0
        %720 = vmatpush1.msra.mxu0 0.0
        %721 = vmatprep.subr.mxu0 0.0
        %722 = vmatpush1.msra.mxu0 0.0
        %723 = vmatprep.subr.mxu0 0.0
        %724 = vmatpush1.msra.mxu0 0.0
        %725 = vmatprep.subr.mxu0 0.0
        %726 = vmatpush1.msra.mxu0 0.0
        %727 = vmatprep.subr.mxu0 0.0
        %728 = vmatpush1.msra.mxu0 0.0
        %729 = vmatprep.subr.mxu0 0.0
        %730 = vmatpush1.msra.mxu0 0.0
        %731 = vmatprep.subr.mxu0 0.0
        %732 = vmatpush1.msra.mxu0 0.0
        %733 = vmatprep.subr.mxu0 0.0
        %734 = vmatpush1.msra.mxu0 0.0
        %735 = vmatprep.subr.mxu0 0.0
        %736 = vmatpush1.msra.mxu0 %v378
        %737 = vmatprep.subr.mxu0 0.0
        %738 = vmatpush1.msra.mxu0 %v377
        %739 = vmatprep.subr.mxu0 0.0
        %740 = vmatpush2.msra.mxu0 0.0
        %741 = vmatprep.subr.mxu0 0.0
        %742 = vmatpush2.msra.mxu0 0.0
        %743 = vmatprep.subr.mxu0 0.0
        %744 = vmatpush2.msra.mxu0 0.0
        %745 = vmatprep.subr.mxu0 0.0
        %746 = vmatpush2.msra.mxu0 0.0
        %747 = vmatprep.subr.mxu0 0.0
        %748 = vmatpush2.msra.mxu0 0.0
        %749 = vmatprep.subr.mxu0 0.0
        %750 = vmatpush2.msra.mxu0 0.0
        %751 = vmatprep.subr.mxu0 0.0
        %752 = vmatpush2.msra.mxu0 0.0
        %753 = vmatprep.subr.mxu0 0.0
        %754 = vmatpush2.msra.mxu0 0.0
        %755 = vmatprep.subr.mxu0 0.0
        %756 = vmatpush2.msra.mxu0 0.0
        %757 = vmatprep.subr.mxu0 0.0
        %758 = vmatpush2.msra.mxu0 0.0
        %759 = vmatprep.subr.mxu0 0.0
        %760 = vmatpush2.msra.mxu0 0.0
        %761 = vmatprep.subr.mxu0 0.0
        %762 = vmatpush2.msra.mxu0 0.0
        %763 = vmatprep.subr.mxu0 0.0
        %764 = vmatpush2.msra.mxu0 0.0
        %765 = vmatprep.subr.mxu0 0.0
        %766 = vmatpush2.msra.mxu0 0.0
        %767 = vmatprep.subr.mxu0 0.0
        %768 = vmatpush2.msra.mxu0 0.0
        %769 = vmatprep.subr.mxu0 0.0
        %770 = vmatpush2.msra.mxu0 0.0
        %771 = vmatprep.mubr.f32.mxu0 0.0
        %772 = vmatmul.mubr.f32.gmra.mxu0 %v684
        %v773 = vpop.f32.mrf.mxu0
        %v774 = vadd.f32 0.0, %v773
        %v775 = vpop.f32.mrf.mxu0
        %776 = vmatprep.mubr.f32.mxu0 0.0
        %777 = vmatmul.mubr.f32.gmra.mxu0 %v687
        %v778 = vpop.f32.mrf.mxu0
        %v779 = vadd.f32 0.0, %v778
        %v780 = vpop.f32.mrf.mxu0
        %781 = vmatprep.mubr.f32.mxu0 0.0
        %782 = vmatmul.mubr.f32.gmra.mxu0 %v690
        %v783 = vpop.f32.mrf.mxu0
        %v784 = vadd.f32 0.0, %v783
        %v785 = vpop.f32.mrf.mxu0
        %786 = vmatprep.mubr.f32.mxu0 0.0
        %787 = vmatmul.mubr.f32.gmra.mxu0 %v693
        %v788 = vpop.f32.mrf.mxu0
        %v789 = vadd.f32 0.0, %v788
        %v790 = vpop.f32.mrf.mxu0
        %791 = vmatprep.mubr.f32.mxu0 0.0
        %792 = vmatmul.mubr.f32.gmra.mxu0 %v696
        %v793 = vpop.f32.mrf.mxu0
        %v794 = vadd.f32 0.0, %v793
        %v795 = vpop.f32.mrf.mxu0
        %796 = vmatprep.mubr.f32.mxu0 0.0
        %797 = vmatmul.mubr.f32.gmra.mxu0 %v699
        %v798 = vpop.f32.mrf.mxu0
        %v799 = vadd.f32 0.0, %v798
        %v800 = vpop.f32.mrf.mxu0
        %801 = vmatprep.mubr.f32.mxu0 0.0
        %802 = vmatmul.mubr.f32.gmra.mxu0 %v702
        %v803 = vpop.f32.mrf.mxu0
        %v804 = vadd.f32 0.0, %v803
        %v805 = vpop.f32.mrf.mxu0
        %806 = vmatprep.mubr.f32.mxu0 0.0
        %807 = vmatmul.mubr.f32.gmra.mxu0 %v705
        %v808 = vpop.f32.mrf.mxu0
        %v809 = vadd.f32 0.0, %v808
        %v810 = vpop.f32.mrf.mxu0
        %811 = vdwg.mxu0
        %812 = vmatprep.subr.mxu0 0.0
        %813 = vmatpush1.msra.mxu0 0.0
        %814 = vmatprep.subr.mxu0 0.0
        %815 = vmatpush1.msra.mxu0 0.0
        %816 = vmatprep.subr.mxu0 0.0
        %817 = vmatpush1.msra.mxu0 0.0
        %818 = vmatprep.subr.mxu0 0.0
        %819 = vmatpush1.msra.mxu0 0.0
        %820 = vmatprep.subr.mxu0 0.0
        %821 = vmatpush1.msra.mxu0 0.0
        %822 = vmatprep.subr.mxu0 0.0
        %823 = vmatpush1.msra.mxu0 0.0
        %824 = vmatprep.subr.mxu0 0.0
        %825 = vmatpush1.msra.mxu0 0.0
        %826 = vmatprep.subr.mxu0 0.0
        %827 = vmatpush1.msra.mxu0 0.0
        %828 = vmatprep.subr.mxu0 0.0
        %829 = vmatpush1.msra.mxu0 0.0
        %830 = vmatprep.subr.mxu0 0.0
        %831 = vmatpush1.msra.mxu0 0.0
        %832 = vmatprep.subr.mxu0 0.0
        %833 = vmatpush1.msra.mxu0 0.0
        %834 = vmatprep.subr.mxu0 0.0
        %835 = vmatpush1.msra.mxu0 0.0
        %836 = vmatprep.subr.mxu0 0.0
        %837 = vmatpush1.msra.mxu0 0.0
        %838 = vmatprep.subr.mxu0 0.0
        %839 = vmatpush1.msra.mxu0 0.0
        %840 = vmatprep.subr.mxu0 0.0
        %841 = vmatpush1.msra.mxu0 %v673
        %842 = vmatprep.subr.mxu0 0.0
        %843 = vmatpush1.msra.mxu0 %v672
        %844 = vmatprep.subr.mxu0 0.0
        %845 = vmatpush2.msra.mxu0 0.0
        %846 = vmatprep.subr.mxu0 0.0
        %847 = vmatpush2.msra.mxu0 0.0
        %848 = vmatprep.subr.mxu0 0.0
        %849 = vmatpush2.msra.mxu0 0.0
        %850 = vmatprep.subr.mxu0 0.0
        %851 = vmatpush2.msra.mxu0 0.0
        %852 = vmatprep.subr.mxu0 0.0
        %853 = vmatpush2.msra.mxu0 0.0
        %854 = vmatprep.subr.mxu0 0.0
        %855 = vmatpush2.msra.mxu0 0.0
        %856 = vmatprep.subr.mxu0 0.0
        %857 = vmatpush2.msra.mxu0 0.0
        %858 = vmatprep.subr.mxu0 0.0
        %859 = vmatpush2.msra.mxu0 0.0
        %860 = vmatprep.subr.mxu0 0.0
        %861 = vmatpush2.msra.mxu0 0.0
        %862 = vmatprep.subr.mxu0 0.0
        %863 = vmatpush2.msra.mxu0 0.0
        %864 = vmatprep.subr.mxu0 0.0
        %865 = vmatpush2.msra.mxu0 0.0
        %866 = vmatprep.subr.mxu0 0.0
        %867 = vmatpush2.msra.mxu0 0.0
        %868 = vmatprep.subr.mxu0 0.0
        %869 = vmatpush2.msra.mxu0 0.0
        %870 = vmatprep.subr.mxu0 0.0
        %871 = vmatpush2.msra.mxu0 0.0
        %872 = vmatprep.subr.mxu0 0.0
        %873 = vmatpush2.msra.mxu0 0.0
        %874 = vmatprep.subr.mxu0 0.0
        %875 = vmatpush2.msra.mxu0 0.0
        %876 = vmatprep.mubr.f32.mxu0 0.0
        %877 = vmatmul.mubr.f32.gmra.mxu0 %v520
        %v878 = vpop.f32.mrf.mxu0
        %v879 = vadd.f32 %v774, %v878
        %v880 = vpop.f32.mrf.mxu0
        %881 = vmatprep.mubr.f32.mxu0 0.0
        %882 = vmatmul.mubr.f32.gmra.mxu0 %v523
        %v883 = vpop.f32.mrf.mxu0
        %v884 = vadd.f32 %v779, %v883
        %v885 = vpop.f32.mrf.mxu0
        %886 = vmatprep.mubr.f32.mxu0 0.0
        %887 = vmatmul.mubr.f32.gmra.mxu0 %v526
        %v888 = vpop.f32.mrf.mxu0
        %v889 = vadd.f32 %v784, %v888
        %v890 = vpop.f32.mrf.mxu0
        %891 = vmatprep.mubr.f32.mxu0 0.0
        %892 = vmatmul.mubr.f32.gmra.mxu0 %v529
        %v893 = vpop.f32.mrf.mxu0
        %v894 = vadd.f32 %v789, %v893
        %v895 = vpop.f32.mrf.mxu0
        %896 = vmatprep.mubr.f32.mxu0 0.0
        %897 = vmatmul.mubr.f32.gmra.mxu0 %v532
        %v898 = vpop.f32.mrf.mxu0
        %v899 = vadd.f32 %v794, %v898
        %v900 = vpop.f32.mrf.mxu0
        %901 = vmatprep.mubr.f32.mxu0 0.0
        %902 = vmatmul.mubr.f32.gmra.mxu0 %v535
        %v903 = vpop.f32.mrf.mxu0
        %v904 = vadd.f32 %v799, %v903
        %v905 = vpop.f32.mrf.mxu0
        %906 = vmatprep.mubr.f32.mxu0 0.0
        %907 = vmatmul.mubr.f32.gmra.mxu0 %v538
        %v908 = vpop.f32.mrf.mxu0
        %v909 = vadd.f32 %v804, %v908
        %v910 = vpop.f32.mrf.mxu0
        %911 = vmatprep.mubr.f32.mxu0 0.0
        %912 = vmatmul.mubr.f32.gmra.mxu0 %v541
        %v913 = vpop.f32.mrf.mxu0
        %v914 = vadd.f32 %v809, %v913
        %v915 = vpop.f32.mrf.mxu0
        %916 = vdwg.mxu0
        %s917 = scalar_lea.vmem [#allocation10], 1
        %v918 = vld [vmem:[%s917] sm:$0x1]
        %v920 = vlaneseq
        %v921 = vshrl.u32 %v920, 7
        %v922 = vsub.s32 0, %v921
        %v923 = vrot.slane %v918, %v922
        %v925 = vadd.f32 %v879, %v923
        %v926 = vadd.f32 %v884, %v923
        %v927 = vadd.f32 %v889, %v923
        %v928 = vadd.f32 %v894, %v923
        %v929 = vadd.f32 %v899, %v923
        %v930 = vadd.f32 %v904, %v923
        %v931 = vadd.f32 %v909, %v923
        %v932 = vadd.f32 %v914, %v923
        %s933 = scalar_lea.vmem %s365, 8 [#allocation11]
        %934 = vst.msk [vmem:[%s933] sm:$0xff] %vm389, %v925
        %935 = vst.msk [vmem:[%s933 + $0x10] sm:$0xff] %vm389, %v926
        %936 = vst.msk [vmem:[%s933 + $0x20] sm:$0xff] %vm389, %v927
        %937 = vst.msk [vmem:[%s933 + $0x30] sm:$0xff] %vm389, %v928
        %938 = vst.msk [vmem:[%s933 + $0x40] sm:$0xff] %vm389, %v929
        %939 = vst.msk [vmem:[%s933 + $0x50] sm:$0xff] %vm389, %v930
        %940 = vst.msk [vmem:[%s933 + $0x60] sm:$0xff] %vm389, %v931
        %941 = vst.msk [vmem:[%s933 + $0x70] sm:$0xff] %vm389, %v932
        %s942 = scalar_lea.vmem [#allocation7], 32
        %v943 = vld [vmem:[%s942] sm:$0xff]
        %v944 = vld [vmem:[%s942 + $0x8] sm:$0xff]
        %s945 = scalar_lea.vmem %s322, 128 [#allocation5]
        %v946 = vld [vmem:[%s945] sm:$0xff]
        %v947 = vld [vmem:[%s945 + $0x10] sm:$0xff]
        %v948 = vld [vmem:[%s945 + $0x20] sm:$0xff]
        %v949 = vld [vmem:[%s945 + $0x30] sm:$0xff]
        %v950 = vld [vmem:[%s945 + $0x40] sm:$0xff]
        %v951 = vld [vmem:[%s945 + $0x50] sm:$0xff]
        %v952 = vld [vmem:[%s945 + $0x60] sm:$0xff]
        %v953 = vld [vmem:[%s945 + $0x70] sm:$0xff]
        %v955 = vsel %vm389, %v946, 0
        %v958 = vsel %vm389, %v947, 0
        %v961 = vsel %vm389, %v948, 0
        %v964 = vsel %vm389, %v949, 0
        %v967 = vsel %vm389, %v950, 0
        %v970 = vsel %vm389, %v951, 0
        %v973 = vsel %vm389, %v952, 0
        %v976 = vsel %vm389, %v953, 0
        %978 = vmatprep.subr.mxu0 0.0
        %979 = vmatpush1.msra.mxu0 0.0
        %980 = vmatprep.subr.mxu0 0.0
        %981 = vmatpush1.msra.mxu0 0.0
        %982 = vmatprep.subr.mxu0 0.0
        %983 = vmatpush1.msra.mxu0 0.0
        %984 = vmatprep.subr.mxu0 0.0
        %985 = vmatpush1.msra.mxu0 0.0
        %986 = vmatprep.subr.mxu0 0.0
        %987 = vmatpush1.msra.mxu0 0.0
        %988 = vmatprep.subr.mxu0 0.0
        %989 = vmatpush1.msra.mxu0 0.0
        %990 = vmatprep.subr.mxu0 0.0
        %991 = vmatpush1.msra.mxu0 0.0
        %992 = vmatprep.subr.mxu0 0.0
        %993 = vmatpush1.msra.mxu0 0.0
        %994 = vmatprep.subr.mxu0 0.0
        %995 = vmatpush1.msra.mxu0 0.0
        %996 = vmatprep.subr.mxu0 0.0
        %997 = vmatpush1.msra.mxu0 0.0
        %998 = vmatprep.subr.mxu0 0.0
        %999 = vmatpush1.msra.mxu0 0.0
        %1000 = vmatprep.subr.mxu0 0.0
        %1001 = vmatpush1.msra.mxu0 0.0
        %1002 = vmatprep.subr.mxu0 0.0
        %1003 = vmatpush1.msra.mxu0 0.0
        %1004 = vmatprep.subr.mxu0 0.0
        %1005 = vmatpush1.msra.mxu0 0.0
        %1006 = vmatprep.subr.mxu0 0.0
        %1007 = vmatpush1.msra.mxu0 %v378
        %1008 = vmatprep.subr.mxu0 0.0
        %1009 = vmatpush1.msra.mxu0 %v377
        %1010 = vmatprep.subr.mxu0 0.0
        %1011 = vmatpush2.msra.mxu0 0.0
        %1012 = vmatprep.subr.mxu0 0.0
        %1013 = vmatpush2.msra.mxu0 0.0
        %1014 = vmatprep.subr.mxu0 0.0
        %1015 = vmatpush2.msra.mxu0 0.0
        %1016 = vmatprep.subr.mxu0 0.0
        %1017 = vmatpush2.msra.mxu0 0.0
        %1018 = vmatprep.subr.mxu0 0.0
        %1019 = vmatpush2.msra.mxu0 0.0
        %1020 = vmatprep.subr.mxu0 0.0
        %1021 = vmatpush2.msra.mxu0 0.0
        %1022 = vmatprep.subr.mxu0 0.0
        %1023 = vmatpush2.msra.mxu0 0.0
        %1024 = vmatprep.subr.mxu0 0.0
        %1025 = vmatpush2.msra.mxu0 0.0
        %1026 = vmatprep.subr.mxu0 0.0
        %1027 = vmatpush2.msra.mxu0 0.0
        %1028 = vmatprep.subr.mxu0 0.0
        %1029 = vmatpush2.msra.mxu0 0.0
        %1030 = vmatprep.subr.mxu0 0.0
        %1031 = vmatpush2.msra.mxu0 0.0
        %1032 = vmatprep.subr.mxu0 0.0
        %1033 = vmatpush2.msra.mxu0 0.0
        %1034 = vmatprep.subr.mxu0 0.0
        %1035 = vmatpush2.msra.mxu0 0.0
        %1036 = vmatprep.subr.mxu0 0.0
        %1037 = vmatpush2.msra.mxu0 0.0
        %1038 = vmatprep.subr.mxu0 0.0
        %1039 = vmatpush2.msra.mxu0 0.0
        %1040 = vmatprep.subr.mxu0 0.0
        %1041 = vmatpush2.msra.mxu0 0.0
        %1042 = vmatprep.mubr.f32.mxu0 0.0
        %1043 = vmatmul.mubr.f32.gmra.mxu0 %v955
        %v1044 = vpop.f32.mrf.mxu0
        %v1045 = vadd.f32 0.0, %v1044
        %v1046 = vpop.f32.mrf.mxu0
        %1047 = vmatprep.mubr.f32.mxu0 0.0
        %1048 = vmatmul.mubr.f32.gmra.mxu0 %v958
        %v1049 = vpop.f32.mrf.mxu0
        %v1050 = vadd.f32 0.0, %v1049
        %v1051 = vpop.f32.mrf.mxu0
        %1052 = vmatprep.mubr.f32.mxu0 0.0
        %1053 = vmatmul.mubr.f32.gmra.mxu0 %v961
        %v1054 = vpop.f32.mrf.mxu0
        %v1055 = vadd.f32 0.0, %v1054
        %v1056 = vpop.f32.mrf.mxu0
        %1057 = vmatprep.mubr.f32.mxu0 0.0
        %1058 = vmatmul.mubr.f32.gmra.mxu0 %v964
        %v1059 = vpop.f32.mrf.mxu0
        %v1060 = vadd.f32 0.0, %v1059
        %v1061 = vpop.f32.mrf.mxu0
        %1062 = vmatprep.mubr.f32.mxu0 0.0
        %1063 = vmatmul.mubr.f32.gmra.mxu0 %v967
        %v1064 = vpop.f32.mrf.mxu0
        %v1065 = vadd.f32 0.0, %v1064
        %v1066 = vpop.f32.mrf.mxu0
        %1067 = vmatprep.mubr.f32.mxu0 0.0
        %1068 = vmatmul.mubr.f32.gmra.mxu0 %v970
        %v1069 = vpop.f32.mrf.mxu0
        %v1070 = vadd.f32 0.0, %v1069
        %v1071 = vpop.f32.mrf.mxu0
        %1072 = vmatprep.mubr.f32.mxu0 0.0
        %1073 = vmatmul.mubr.f32.gmra.mxu0 %v973
        %v1074 = vpop.f32.mrf.mxu0
        %v1075 = vadd.f32 0.0, %v1074
        %v1076 = vpop.f32.mrf.mxu0
        %1077 = vmatprep.mubr.f32.mxu0 0.0
        %1078 = vmatmul.mubr.f32.gmra.mxu0 %v976
        %v1079 = vpop.f32.mrf.mxu0
        %v1080 = vadd.f32 0.0, %v1079
        %v1081 = vpop.f32.mrf.mxu0
        %1082 = vdwg.mxu0
        %1083 = vmatprep.subr.mxu0 0.0
        %1084 = vmatpush1.msra.mxu0 0.0
        %1085 = vmatprep.subr.mxu0 0.0
        %1086 = vmatpush1.msra.mxu0 0.0
        %1087 = vmatprep.subr.mxu0 0.0
        %1088 = vmatpush1.msra.mxu0 0.0
        %1089 = vmatprep.subr.mxu0 0.0
        %1090 = vmatpush1.msra.mxu0 0.0
        %1091 = vmatprep.subr.mxu0 0.0
        %1092 = vmatpush1.msra.mxu0 0.0
        %1093 = vmatprep.subr.mxu0 0.0
        %1094 = vmatpush1.msra.mxu0 0.0
        %1095 = vmatprep.subr.mxu0 0.0
        %1096 = vmatpush1.msra.mxu0 0.0
        %1097 = vmatprep.subr.mxu0 0.0
        %1098 = vmatpush1.msra.mxu0 0.0
        %1099 = vmatprep.subr.mxu0 0.0
        %1100 = vmatpush1.msra.mxu0 0.0
        %1101 = vmatprep.subr.mxu0 0.0
        %1102 = vmatpush1.msra.mxu0 0.0
        %1103 = vmatprep.subr.mxu0 0.0
        %1104 = vmatpush1.msra.mxu0 0.0
        %1105 = vmatprep.subr.mxu0 0.0
        %1106 = vmatpush1.msra.mxu0 0.0
        %1107 = vmatprep.subr.mxu0 0.0
        %1108 = vmatpush1.msra.mxu0 0.0
        %1109 = vmatprep.subr.mxu0 0.0
        %1110 = vmatpush1.msra.mxu0 0.0
        %1111 = vmatprep.subr.mxu0 0.0
        %1112 = vmatpush1.msra.mxu0 %v944
        %1113 = vmatprep.subr.mxu0 0.0
        %1114 = vmatpush1.msra.mxu0 %v943
        %1115 = vmatprep.subr.mxu0 0.0
        %1116 = vmatpush2.msra.mxu0 0.0
        %1117 = vmatprep.subr.mxu0 0.0
        %1118 = vmatpush2.msra.mxu0 0.0
        %1119 = vmatprep.subr.mxu0 0.0
        %1120 = vmatpush2.msra.mxu0 0.0
        %1121 = vmatprep.subr.mxu0 0.0
        %1122 = vmatpush2.msra.mxu0 0.0
        %1123 = vmatprep.subr.mxu0 0.0
        %1124 = vmatpush2.msra.mxu0 0.0
        %1125 = vmatprep.subr.mxu0 0.0
        %1126 = vmatpush2.msra.mxu0 0.0
        %1127 = vmatprep.subr.mxu0 0.0
        %1128 = vmatpush2.msra.mxu0 0.0
        %1129 = vmatprep.subr.mxu0 0.0
        %1130 = vmatpush2.msra.mxu0 0.0
        %1131 = vmatprep.subr.mxu0 0.0
        %1132 = vmatpush2.msra.mxu0 0.0
        %1133 = vmatprep.subr.mxu0 0.0
        %1134 = vmatpush2.msra.mxu0 0.0
        %1135 = vmatprep.subr.mxu0 0.0
        %1136 = vmatpush2.msra.mxu0 0.0
        %1137 = vmatprep.subr.mxu0 0.0
        %1138 = vmatpush2.msra.mxu0 0.0
        %1139 = vmatprep.subr.mxu0 0.0
        %1140 = vmatpush2.msra.mxu0 0.0
        %1141 = vmatprep.subr.mxu0 0.0
        %1142 = vmatpush2.msra.mxu0 0.0
        %1143 = vmatprep.subr.mxu0 0.0
        %1144 = vmatpush2.msra.mxu0 0.0
        %1145 = vmatprep.subr.mxu0 0.0
        %1146 = vmatpush2.msra.mxu0 0.0
        %1147 = vmatprep.mubr.f32.mxu0 0.0
        %1148 = vmatmul.mubr.f32.gmra.mxu0 %v520
        %v1149 = vpop.f32.mrf.mxu0
        %v1150 = vadd.f32 %v1045, %v1149
        %v1151 = vpop.f32.mrf.mxu0
        %1152 = vmatprep.mubr.f32.mxu0 0.0
        %1153 = vmatmul.mubr.f32.gmra.mxu0 %v523
        %v1154 = vpop.f32.mrf.mxu0
        %v1155 = vadd.f32 %v1050, %v1154
        %v1156 = vpop.f32.mrf.mxu0
        %1157 = vmatprep.mubr.f32.mxu0 0.0
        %1158 = vmatmul.mubr.f32.gmra.mxu0 %v526
        %v1159 = vpop.f32.mrf.mxu0
        %v1160 = vadd.f32 %v1055, %v1159
        %v1161 = vpop.f32.mrf.mxu0
        %1162 = vmatprep.mubr.f32.mxu0 0.0
        %1163 = vmatmul.mubr.f32.gmra.mxu0 %v529
        %v1164 = vpop.f32.mrf.mxu0
        %v1165 = vadd.f32 %v1060, %v1164
        %v1166 = vpop.f32.mrf.mxu0
        %1167 = vmatprep.mubr.f32.mxu0 0.0
        %1168 = vmatmul.mubr.f32.gmra.mxu0 %v532
        %v1169 = vpop.f32.mrf.mxu0
        %v1170 = vadd.f32 %v1065, %v1169
        %v1171 = vpop.f32.mrf.mxu0
        %1172 = vmatprep.mubr.f32.mxu0 0.0
        %1173 = vmatmul.mubr.f32.gmra.mxu0 %v535
        %v1174 = vpop.f32.mrf.mxu0
        %v1175 = vadd.f32 %v1070, %v1174
        %v1176 = vpop.f32.mrf.mxu0
        %1177 = vmatprep.mubr.f32.mxu0 0.0
        %1178 = vmatmul.mubr.f32.gmra.mxu0 %v538
        %v1179 = vpop.f32.mrf.mxu0
        %v1180 = vadd.f32 %v1075, %v1179
        %v1181 = vpop.f32.mrf.mxu0
        %1182 = vmatprep.mubr.f32.mxu0 0.0
        %1183 = vmatmul.mubr.f32.gmra.mxu0 %v541
        %v1184 = vpop.f32.mrf.mxu0
        %v1185 = vadd.f32 %v1080, %v1184
        %v1186 = vpop.f32.mrf.mxu0
        %1187 = vdwg.mxu0
        %s1188 = scalar_lea.vmem [#allocation10], 2
        %v1189 = vld [vmem:[%s1188] sm:$0x1]
        %v1191 = vlaneseq
        %v1192 = vshrl.u32 %v1191, 7
        %v1193 = vsub.s32 0, %v1192
        %v1194 = vrot.slane %v1189, %v1193
        %v1196 = vadd.f32 %v1150, %v1194
        %v1197 = vadd.f32 %v1155, %v1194
        %v1198 = vadd.f32 %v1160, %v1194
        %v1199 = vadd.f32 %v1165, %v1194
        %v1200 = vadd.f32 %v1170, %v1194
        %v1201 = vadd.f32 %v1175, %v1194
        %v1202 = vadd.f32 %v1180, %v1194
        %v1203 = vadd.f32 %v1185, %v1194
        %s1204 = scalar_lea.vmem %s365, 128 [#allocation11]
        %1205 = vst.msk [vmem:[%s1204] sm:$0xff] %vm389, %v1196
        %1206 = vst.msk [vmem:[%s1204 + $0x10] sm:$0xff] %vm389, %v1197
        %1207 = vst.msk [vmem:[%s1204 + $0x20] sm:$0xff] %vm389, %v1198
        %1208 = vst.msk [vmem:[%s1204 + $0x30] sm:$0xff] %vm389, %v1199
        %1209 = vst.msk [vmem:[%s1204 + $0x40] sm:$0xff] %vm389, %v1200
        %1210 = vst.msk [vmem:[%s1204 + $0x50] sm:$0xff] %vm389, %v1201
        %1211 = vst.msk [vmem:[%s1204 + $0x60] sm:$0xff] %vm389, %v1202
        %1212 = vst.msk [vmem:[%s1204 + $0x70] sm:$0xff] %vm389, %v1203
        %s1213 = scalar_lea.vmem [#allocation7], 48
        %v1214 = vld [vmem:[%s1213] sm:$0xff]
        %v1215 = vld [vmem:[%s1213 + $0x8] sm:$0xff]
        %s1216 = scalar_lea.vmem %s322, 136 [#allocation5]
        %v1217 = vld [vmem:[%s1216] sm:$0xff]
        %v1218 = vld [vmem:[%s1216 + $0x10] sm:$0xff]
        %v1219 = vld [vmem:[%s1216 + $0x20] sm:$0xff]
        %v1220 = vld [vmem:[%s1216 + $0x30] sm:$0xff]
        %v1221 = vld [vmem:[%s1216 + $0x40] sm:$0xff]
        %v1222 = vld [vmem:[%s1216 + $0x50] sm:$0xff]
        %v1223 = vld [vmem:[%s1216 + $0x60] sm:$0xff]
        %v1224 = vld [vmem:[%s1216 + $0x70] sm:$0xff]
        %v1226 = vsel %vm389, %v1217, 0
        %v1229 = vsel %vm389, %v1218, 0
        %v1232 = vsel %vm389, %v1219, 0
        %v1235 = vsel %vm389, %v1220, 0
        %v1238 = vsel %vm389, %v1221, 0
        %v1241 = vsel %vm389, %v1222, 0
        %v1244 = vsel %vm389, %v1223, 0
        %v1247 = vsel %vm389, %v1224, 0
        %1249 = vmatprep.subr.mxu0 0.0
        %1250 = vmatpush1.msra.mxu0 0.0
        %1251 = vmatprep.subr.mxu0 0.0
        %1252 = vmatpush1.msra.mxu0 0.0
        %1253 = vmatprep.subr.mxu0 0.0
        %1254 = vmatpush1.msra.mxu0 0.0
        %1255 = vmatprep.subr.mxu0 0.0
        %1256 = vmatpush1.msra.mxu0 0.0
        %1257 = vmatprep.subr.mxu0 0.0
        %1258 = vmatpush1.msra.mxu0 0.0
        %1259 = vmatprep.subr.mxu0 0.0
        %1260 = vmatpush1.msra.mxu0 0.0
        %1261 = vmatprep.subr.mxu0 0.0
        %1262 = vmatpush1.msra.mxu0 0.0
        %1263 = vmatprep.subr.mxu0 0.0
        %1264 = vmatpush1.msra.mxu0 0.0
        %1265 = vmatprep.subr.mxu0 0.0
        %1266 = vmatpush1.msra.mxu0 0.0
        %1267 = vmatprep.subr.mxu0 0.0
        %1268 = vmatpush1.msra.mxu0 0.0
        %1269 = vmatprep.subr.mxu0 0.0
        %1270 = vmatpush1.msra.mxu0 0.0
        %1271 = vmatprep.subr.mxu0 0.0
        %1272 = vmatpush1.msra.mxu0 0.0
        %1273 = vmatprep.subr.mxu0 0.0
        %1274 = vmatpush1.msra.mxu0 0.0
        %1275 = vmatprep.subr.mxu0 0.0
        %1276 = vmatpush1.msra.mxu0 0.0
        %1277 = vmatprep.subr.mxu0 0.0
        %1278 = vmatpush1.msra.mxu0 %v378
        %1279 = vmatprep.subr.mxu0 0.0
        %1280 = vmatpush1.msra.mxu0 %v377
        %1281 = vmatprep.subr.mxu0 0.0
        %1282 = vmatpush2.msra.mxu0 0.0
        %1283 = vmatprep.subr.mxu0 0.0
        %1284 = vmatpush2.msra.mxu0 0.0
        %1285 = vmatprep.subr.mxu0 0.0
        %1286 = vmatpush2.msra.mxu0 0.0
        %1287 = vmatprep.subr.mxu0 0.0
        %1288 = vmatpush2.msra.mxu0 0.0
        %1289 = vmatprep.subr.mxu0 0.0
        %1290 = vmatpush2.msra.mxu0 0.0
        %1291 = vmatprep.subr.mxu0 0.0
        %1292 = vmatpush2.msra.mxu0 0.0
        %1293 = vmatprep.subr.mxu0 0.0
        %1294 = vmatpush2.msra.mxu0 0.0
        %1295 = vmatprep.subr.mxu0 0.0
        %1296 = vmatpush2.msra.mxu0 0.0
        %1297 = vmatprep.subr.mxu0 0.0
        %1298 = vmatpush2.msra.mxu0 0.0
        %1299 = vmatprep.subr.mxu0 0.0
        %1300 = vmatpush2.msra.mxu0 0.0
        %1301 = vmatprep.subr.mxu0 0.0
        %1302 = vmatpush2.msra.mxu0 0.0
        %1303 = vmatprep.subr.mxu0 0.0
        %1304 = vmatpush2.msra.mxu0 0.0
        %1305 = vmatprep.subr.mxu0 0.0
        %1306 = vmatpush2.msra.mxu0 0.0
        %1307 = vmatprep.subr.mxu0 0.0
        %1308 = vmatpush2.msra.mxu0 0.0
        %1309 = vmatprep.subr.mxu0 0.0
        %1310 = vmatpush2.msra.mxu0 0.0
        %1311 = vmatprep.subr.mxu0 0.0
        %1312 = vmatpush2.msra.mxu0 0.0
        %1313 = vmatprep.mubr.f32.mxu0 0.0
        %1314 = vmatmul.mubr.f32.gmra.mxu0 %v1226
        %v1315 = vpop.f32.mrf.mxu0
        %v1316 = vadd.f32 0.0, %v1315
        %v1317 = vpop.f32.mrf.mxu0
        %1318 = vmatprep.mubr.f32.mxu0 0.0
        %1319 = vmatmul.mubr.f32.gmra.mxu0 %v1229
        %v1320 = vpop.f32.mrf.mxu0
        %v1321 = vadd.f32 0.0, %v1320
        %v1322 = vpop.f32.mrf.mxu0
        %1323 = vmatprep.mubr.f32.mxu0 0.0
        %1324 = vmatmul.mubr.f32.gmra.mxu0 %v1232
        %v1325 = vpop.f32.mrf.mxu0
        %v1326 = vadd.f32 0.0, %v1325
        %v1327 = vpop.f32.mrf.mxu0
        %1328 = vmatprep.mubr.f32.mxu0 0.0
        %1329 = vmatmul.mubr.f32.gmra.mxu0 %v1235
        %v1330 = vpop.f32.mrf.mxu0
        %v1331 = vadd.f32 0.0, %v1330
        %v1332 = vpop.f32.mrf.mxu0
        %1333 = vmatprep.mubr.f32.mxu0 0.0
        %1334 = vmatmul.mubr.f32.gmra.mxu0 %v1238
        %v1335 = vpop.f32.mrf.mxu0
        %v1336 = vadd.f32 0.0, %v1335
        %v1337 = vpop.f32.mrf.mxu0
        %1338 = vmatprep.mubr.f32.mxu0 0.0
        %1339 = vmatmul.mubr.f32.gmra.mxu0 %v1241
        %v1340 = vpop.f32.mrf.mxu0
        %v1341 = vadd.f32 0.0, %v1340
        %v1342 = vpop.f32.mrf.mxu0
        %1343 = vmatprep.mubr.f32.mxu0 0.0
        %1344 = vmatmul.mubr.f32.gmra.mxu0 %v1244
        %v1345 = vpop.f32.mrf.mxu0
        %v1346 = vadd.f32 0.0, %v1345
        %v1347 = vpop.f32.mrf.mxu0
        %1348 = vmatprep.mubr.f32.mxu0 0.0
        %1349 = vmatmul.mubr.f32.gmra.mxu0 %v1247
        %v1350 = vpop.f32.mrf.mxu0
        %v1351 = vadd.f32 0.0, %v1350
        %v1352 = vpop.f32.mrf.mxu0
        %1353 = vdwg.mxu0
        %1354 = vmatprep.subr.mxu0 0.0
        %1355 = vmatpush1.msra.mxu0 0.0
        %1356 = vmatprep.subr.mxu0 0.0
        %1357 = vmatpush1.msra.mxu0 0.0
        %1358 = vmatprep.subr.mxu0 0.0
        %1359 = vmatpush1.msra.mxu0 0.0
        %1360 = vmatprep.subr.mxu0 0.0
        %1361 = vmatpush1.msra.mxu0 0.0
        %1362 = vmatprep.subr.mxu0 0.0
        %1363 = vmatpush1.msra.mxu0 0.0
        %1364 = vmatprep.subr.mxu0 0.0
        %1365 = vmatpush1.msra.mxu0 0.0
        %1366 = vmatprep.subr.mxu0 0.0
        %1367 = vmatpush1.msra.mxu0 0.0
        %1368 = vmatprep.subr.mxu0 0.0
        %1369 = vmatpush1.msra.mxu0 0.0
        %1370 = vmatprep.subr.mxu0 0.0
        %1371 = vmatpush1.msra.mxu0 0.0
        %1372 = vmatprep.subr.mxu0 0.0
        %1373 = vmatpush1.msra.mxu0 0.0
        %1374 = vmatprep.subr.mxu0 0.0
        %1375 = vmatpush1.msra.mxu0 0.0
        %1376 = vmatprep.subr.mxu0 0.0
        %1377 = vmatpush1.msra.mxu0 0.0
        %1378 = vmatprep.subr.mxu0 0.0
        %1379 = vmatpush1.msra.mxu0 0.0
        %1380 = vmatprep.subr.mxu0 0.0
        %1381 = vmatpush1.msra.mxu0 0.0
        %1382 = vmatprep.subr.mxu0 0.0
        %1383 = vmatpush1.msra.mxu0 %v1215
        %1384 = vmatprep.subr.mxu0 0.0
        %1385 = vmatpush1.msra.mxu0 %v1214
        %1386 = vmatprep.subr.mxu0 0.0
        %1387 = vmatpush2.msra.mxu0 0.0
        %1388 = vmatprep.subr.mxu0 0.0
        %1389 = vmatpush2.msra.mxu0 0.0
        %1390 = vmatprep.subr.mxu0 0.0
        %1391 = vmatpush2.msra.mxu0 0.0
        %1392 = vmatprep.subr.mxu0 0.0
        %1393 = vmatpush2.msra.mxu0 0.0
        %1394 = vmatprep.subr.mxu0 0.0
        %1395 = vmatpush2.msra.mxu0 0.0
        %1396 = vmatprep.subr.mxu0 0.0
        %1397 = vmatpush2.msra.mxu0 0.0
        %1398 = vmatprep.subr.mxu0 0.0
        %1399 = vmatpush2.msra.mxu0 0.0
        %1400 = vmatprep.subr.mxu0 0.0
        %1401 = vmatpush2.msra.mxu0 0.0
        %1402 = vmatprep.subr.mxu0 0.0
        %1403 = vmatpush2.msra.mxu0 0.0
        %1404 = vmatprep.subr.mxu0 0.0
        %1405 = vmatpush2.msra.mxu0 0.0
        %1406 = vmatprep.subr.mxu0 0.0
        %1407 = vmatpush2.msra.mxu0 0.0
        %1408 = vmatprep.subr.mxu0 0.0
        %1409 = vmatpush2.msra.mxu0 0.0
        %1410 = vmatprep.subr.mxu0 0.0
        %1411 = vmatpush2.msra.mxu0 0.0
        %1412 = vmatprep.subr.mxu0 0.0
        %1413 = vmatpush2.msra.mxu0 0.0
        %1414 = vmatprep.subr.mxu0 0.0
        %1415 = vmatpush2.msra.mxu0 0.0
        %1416 = vmatprep.subr.mxu0 0.0
        %1417 = vmatpush2.msra.mxu0 0.0
        %1418 = vmatprep.mubr.f32.mxu0 0.0
        %1419 = vmatmul.mubr.f32.gmra.mxu0 %v520
        %v1420 = vpop.f32.mrf.mxu0
        %v1421 = vadd.f32 %v1316, %v1420
        %v1422 = vpop.f32.mrf.mxu0
        %1423 = vmatprep.mubr.f32.mxu0 0.0
        %1424 = vmatmul.mubr.f32.gmra.mxu0 %v523
        %v1425 = vpop.f32.mrf.mxu0
        %v1426 = vadd.f32 %v1321, %v1425
        %v1427 = vpop.f32.mrf.mxu0
        %1428 = vmatprep.mubr.f32.mxu0 0.0
        %1429 = vmatmul.mubr.f32.gmra.mxu0 %v526
        %v1430 = vpop.f32.mrf.mxu0
        %v1431 = vadd.f32 %v1326, %v1430
        %v1432 = vpop.f32.mrf.mxu0
        %1433 = vmatprep.mubr.f32.mxu0 0.0
        %1434 = vmatmul.mubr.f32.gmra.mxu0 %v529
        %v1435 = vpop.f32.mrf.mxu0
        %v1436 = vadd.f32 %v1331, %v1435
        %v1437 = vpop.f32.mrf.mxu0
        %1438 = vmatprep.mubr.f32.mxu0 0.0
        %1439 = vmatmul.mubr.f32.gmra.mxu0 %v532
        %v1440 = vpop.f32.mrf.mxu0
        %v1441 = vadd.f32 %v1336, %v1440
        %v1442 = vpop.f32.mrf.mxu0
        %1443 = vmatprep.mubr.f32.mxu0 0.0
        %1444 = vmatmul.mubr.f32.gmra.mxu0 %v535
        %v1445 = vpop.f32.mrf.mxu0
        %v1446 = vadd.f32 %v1341, %v1445
        %v1447 = vpop.f32.mrf.mxu0
        %1448 = vmatprep.mubr.f32.mxu0 0.0
        %1449 = vmatmul.mubr.f32.gmra.mxu0 %v538
        %v1450 = vpop.f32.mrf.mxu0
        %v1451 = vadd.f32 %v1346, %v1450
        %v1452 = vpop.f32.mrf.mxu0
        %1453 = vmatprep.mubr.f32.mxu0 0.0
        %1454 = vmatmul.mubr.f32.gmra.mxu0 %v541
        %v1455 = vpop.f32.mrf.mxu0
        %v1456 = vadd.f32 %v1351, %v1455
        %v1457 = vpop.f32.mrf.mxu0
        %1458 = vdwg.mxu0
        %s1459 = scalar_lea.vmem [#allocation10], 3
        %v1460 = vld [vmem:[%s1459] sm:$0x1]
        %v1462 = vlaneseq
        %v1463 = vshrl.u32 %v1462, 7
        %v1464 = vsub.s32 0, %v1463
        %v1465 = vrot.slane %v1460, %v1464
        %v1467 = vadd.f32 %v1421, %v1465
        %v1468 = vadd.f32 %v1426, %v1465
        %v1469 = vadd.f32 %v1431, %v1465
        %v1470 = vadd.f32 %v1436, %v1465
        %v1471 = vadd.f32 %v1441, %v1465
        %v1472 = vadd.f32 %v1446, %v1465
        %v1473 = vadd.f32 %v1451, %v1465
        %v1474 = vadd.f32 %v1456, %v1465
        %s1475 = scalar_lea.vmem %s365, 136 [#allocation11]
        %1476 = vst.msk [vmem:[%s1475] sm:$0xff] %vm389, %v1467
        %1477 = vst.msk [vmem:[%s1475 + $0x10] sm:$0xff] %vm389, %v1468
        %1478 = vst.msk [vmem:[%s1475 + $0x20] sm:$0xff] %vm389, %v1469
        %1479 = vst.msk [vmem:[%s1475 + $0x30] sm:$0xff] %vm389, %v1470
        %1480 = vst.msk [vmem:[%s1475 + $0x40] sm:$0xff] %vm389, %v1471
        %1481 = vst.msk [vmem:[%s1475 + $0x50] sm:$0xff] %vm389, %v1472
        %1482 = vst.msk [vmem:[%s1475 + $0x60] sm:$0xff] %vm389, %v1473
        %1483 = vst.msk [vmem:[%s1475 + $0x70] sm:$0xff] %vm389, %v1474
        %s1484 = sand.u32 %s180, 1
        %s1485 = scalar_lea.sflag [#allocation4], %s1484
        %s1486 = sand.u32 %s180, 1
        %s1487 = smul.addr %s1486, 256
        %s1488 = scalar_lea.vmem [#allocation11], %s1487
        // Predicated region
        $region61: #{tpu_custom_call.1} parent=39 // pred_check
          %p1489 = pneg %p190
        $region62: #{tpu_custom_call.1} parent=39 // pred_check_branch
          %1491 = sbr.rel (%p1489) target = $region64
        $region63: #{tpu_custom_call.1} parent=39 // pred_region
          %s1492 = smul.u32 8, %s33
          %s1494 = ssub.s32 4096, 4096
          %1495 = vsyncadd %s1485, %s1494
          %s1496 = smul.addr %s1492, 2
          %s1497 = smul.addr %s32, 32
          %s1498 = sadd.s32 %s1496, %s1497
          %s1499 = smul.addr %s31, 256
          %s1500 = sadd.s32 %s1498, %s1499
          %s1501 = smul.addr %s1500, 128
          %s1502 = scalar_lea.hbm %s5, %s1501
          %s1503 = sshll.u32 %s1488, 4
          %s1504 = int_to_ptr.vmem [resolvable:$true] %s1503
          %1509 = dma.vmem_to_hbm [thread:$0]  %s1504, 4096, %s1502, %s1485, 128, 128, 8
        $region64: #{tpu_custom_call.1} parent=39 // pred_fallthru
          _
      $region40: #{tpu_custom_call.1} parent=5 // pred_fallthru
        _
      %p1510 = scmp.le.s32.totalorder 2, %s21
      // Predicated region
      $region65: #{tpu_custom_call.1} parent=5 // pred_check
        %p1511 = pneg %p1510
      $region66: #{tpu_custom_call.1} parent=5 // pred_check_branch
        %1513 = sbr.rel (%p1511) target = $region68
      $region67: #{tpu_custom_call.1} parent=5 // pred_region
        %s1514 = ssub.s32 %s21, 2
        // Predicated region
        $region69: #{tpu_custom_call.1} parent=67 // pred_check
          %p1515 = pneg %p196
        $region70: #{tpu_custom_call.1} parent=67 // pred_check_branch
          %1517 = sbr.rel (%p1515) target = $region72
        $region71: #{tpu_custom_call.1} parent=67 // pred_region
          %s1518 = sand.u32 %s181, 1
          %s1519 = scalar_lea.sflag [#allocation4], %s1518
          %s1520 = sand.u32 %s181, 1
          %s1521 = smul.addr %s1520, 256
          %s1522 = scalar_lea.vmem [#allocation11], %s1521
          %1523 = dma.done %s1519, 4096
        $region72: #{tpu_custom_call.1} parent=67 // pred_fallthru
          _
      $region68: #{tpu_custom_call.1} parent=5 // pred_fallthru
        _
    $region6: #{tpu_custom_call.1} parent=1 // loop_footer
      %s25 = sadd.s32 1, %s21
    $region7: #{tpu_custom_call.1} parent=1 // loop_footer_branch
      %20 = sbr.rel target = $region3
    $region8: #{tpu_custom_call.1} parent=1 // loop_exit
      _
    %1524 = vsyncpa [#allocation3], 1
    %s1525 = scalar_lea.sflag [#allocation3], 1
    %1526 = vsyncpa %s1525, 1
    %1527 = vsyncpa [#allocation6], 1
    %s1528 = scalar_lea.sflag [#allocation6], 1
    %1529 = vsyncpa %s1528, 1
    %1530 = vsyncpa [#allocation9], 1
    %1531 = vsyncpa [#allocation4], 1
    %s1532 = scalar_lea.sflag [#allocation4], 1
    %1533 = vsyncpa %s1532, 1

</llo_original>
